<compile_context>
chip_gen: v7x
topology: tpu7x:2x2x1
jax: 0.10.0
libtpu: 0.0.40
codegen_flags: <defaults>
</compile_context>

<pallas_src>
import jax
import jax.numpy as jnp
from jax.experimental import pallas as pl
from jax.experimental.pallas import tpu as pltpu

LANE = 128
_VMEM_LIMIT = 32 * 1024 * 1024  # tiles chosen below need far less; safe on v5e/v6e/v7x


def _round_up(x, m):
    return ((x + m - 1) // m) * m


def _choose_tiles(n_pad, tm_target=256, tk_target=512):
    """Row tile TM and adjacency-contraction tile TK; multiples of 128 that divide n_pad.
    Sized so (TM,TK) bf16 adj tiles + (TK,h) feature tiles + f32 accumulator, double
    buffered, stay well inside v7x's 64 MiB physical / 32 MiB scoped VMEM."""
    tm = min(tm_target, n_pad)
    while n_pad % tm:
        tm -= LANE
    tk = min(tk_target, n_pad)
    while n_pad % tk:
        tk -= LANE
    return tm, tk


# --------------------------------------------------------------------------- kernels
def fc_kernel(x_ref, w_ref, b_ref, z_ref):
    """z = x @ W + b  (bf16 operands, f32 accumulate, f32 bias; cast to output dtype)."""
    z = jnp.dot(x_ref[...], w_ref[...], preferred_element_type=jnp.float32) + b_ref[...]
    z_ref[...] = z.astype(z_ref.dtype)


def prop_fc_kernel(adj_ref, z_ref, w_ref, b_ref, hid_ref, zn_ref, acc_ref):
    """acc += A_tile @ z_tile over the K axis; finalize: h = relu(acc); z' = h @ W2 + b2.
    Writes z' as f32 (hidden_feature) and as bf16 (input to the next propagation).
    Dropout is identity in eval mode, so it is omitted."""
    k = pl.program_id(1)

    @pl.when(k == 0)
    def _():
        acc_ref[...] = jnp.zeros_like(acc_ref)

    acc_ref[...] += jnp.dot(adj_ref[...], z_ref[...], preferred_element_type=jnp.float32)

    @pl.when(k == pl.num_programs(1) - 1)
    def _():
        h = jnp.maximum(acc_ref[...], 0.0).astype(w_ref.dtype)
        z_next = jnp.dot(h, w_ref[...], preferred_element_type=jnp.float32) + b_ref[...]
        hid_ref[...] = z_next.astype(hid_ref.dtype)
        zn_ref[...] = z_next.astype(zn_ref.dtype)


def prop_cls_kernel(adj_ref, z_ref, w_ref, b_ref, out_ref, acc_ref):
    """acc += A_tile @ z_tile over the K axis; finalize: relu -> fc3 -> log_softmax.
    Padded class lanes carry a -inf bias, so exp() of them is exactly 0 in the sum."""
    k = pl.program_id(1)

    @pl.when(k == 0)
    def _():
        acc_ref[...] = jnp.zeros_like(acc_ref)

    acc_ref[...] += jnp.dot(adj_ref[...], z_ref[...], preferred_element_type=jnp.float32)

    @pl.when(k == pl.num_programs(1) - 1)
    def _():
        h = jnp.maximum(acc_ref[...], 0.0).astype(w_ref.dtype)
        logits = jnp.dot(h, w_ref[...], preferred_element_type=jnp.float32) + b_ref[...]
        m = jnp.max(logits, axis=1, keepdims=True)
        shifted = logits - m
        lse = jnp.log(jnp.sum(jnp.exp(shifted), axis=1, keepdims=True))
        out_ref[...] = (shifted - lse).astype(out_ref.dtype)


# --------------------------------------------------------------------------- wrapper
def gnn_forward(x_in, adj, params, return_hidden_features=False,
                compute_dtype=jnp.bfloat16):
    """params (PyTorch-convention): w1 (h1,F), b1 (h1,), w2 (h2,h1), b2 (h2,),
    w3 (C,h2), b3 (C,).  Returns log_softmax(logits) and optionally hidden_feature."""
    n, f = x_in.shape
    h1 = params["w1"].shape[0]
    h2 = params["w2"].shape[0]
    c = params["w3"].shape[0]

    n_pad = _round_up(max(n, 8), LANE)
    f_pad = _round_up(f, LANE)
    h1_pad = _round_up(h1, LANE)
    h2_pad = _round_up(h2, LANE)
    c_pad = _round_up(c, LANE)

    tm, tk = _choose_tiles(n_pad)
    n_rows = n_pad // tm
    n_k = n_pad // tk

    cdt = compute_dtype
    f32 = jnp.float32
    isz = jnp.dtype(cdt).itemsize

    # Zero-padded, pre-transposed (in, out), lane-dense operands; MXU operands in bf16.
    xp = jnp.zeros((n_pad, f_pad), cdt).at[:n, :f].set(x_in.astype(cdt))
    ap = jnp.zeros((n_pad, n_pad), cdt).at[:n, :n].set(adj.astype(cdt))
    w1 = jnp.zeros((f_pad, h1_pad), cdt).at[:f, :h1].set(params["w1"].T.astype(cdt))
    w2 = jnp.zeros((h1_pad, h2_pad), cdt).at[:h1, :h2].set(params["w2"].T.astype(cdt))
    w3 = jnp.zeros((h2_pad, c_pad), cdt).at[:h2, :c].set(params["w3"].T.astype(cdt))
    b1 = jnp.zeros((1, h1_pad), f32).at[0, :h1].set(params["b1"].astype(f32))
    b2 = jnp.zeros((1, h2_pad), f32).at[0, :h2].set(params["b2"].astype(f32))
    b3 = jnp.full((1, c_pad), -jnp.inf, f32).at[0, :c].set(params["b3"].astype(f32))

    cp_rows = pltpu.CompilerParams(dimension_semantics=("parallel",),
                                   vmem_limit_bytes=_VMEM_LIMIT)
    cp_prop = pltpu.CompilerParams(dimension_semantics=("parallel", "arbitrary"),
                                   vmem_limit_bytes=_VMEM_LIMIT)

    # ---- fc1: z0 = x @ W1 + b1, tiled over node row blocks -------------------------
    z0 = pl.pallas_call(
        fc_kernel,
        out_shape=jax.ShapeDtypeStruct((n_pad, h1_pad), cdt),
        grid_spec=pltpu.PrefetchScalarGridSpec(
            num_scalar_prefetch=0,
            grid=(n_rows,),
            in_specs=[pl.BlockSpec((tm, f_pad), lambda i: (i, 0)),
                      pl.BlockSpec((f_pad, h1_pad), lambda i: (0, 0)),
                      pl.BlockSpec((1, h1_pad), lambda i: (0, 0))],
            out_specs=pl.BlockSpec((tm, h1_pad), lambda i: (i, 0)),
        ),
        compiler_params=cp_rows,
        cost_estimate=pl.CostEstimate(
            flops=2 * n_pad * f_pad * h1_pad,
            transcendentals=0,
            bytes_accessed=(n_pad * f_pad + f_pad * h1_pad + n_pad * h1_pad) * isz),
    )(xp, w1, b1)

    # ---- A @ z0 -> relu -> fc2 (hidden_feature + bf16 copy for next stage) ---------
    hid, z1 = pl.pallas_call(
        prop_fc_kernel,
        out_shape=(jax.ShapeDtypeStruct((n_pad, h2_pad), f32),
                   jax.ShapeDtypeStruct((n_pad, h2_pad), cdt)),
        grid_spec=pltpu.PrefetchScalarGridSpec(
            num_scalar_prefetch=0,
            grid=(n_rows, n_k),
            in_specs=[pl.BlockSpec((tm, tk), lambda i, k: (i, k)),
                      pl.BlockSpec((tk, h1_pad), lambda i, k: (k, 0)),
                      pl.BlockSpec((h1_pad, h2_pad), lambda i, k: (0, 0)),
                      pl.BlockSpec((1, h2_pad), lambda i, k: (0, 0))],
            out_specs=(pl.BlockSpec((tm, h2_pad), lambda i, k: (i, 0)),
                       pl.BlockSpec((tm, h2_pad), lambda i, k: (i, 0))),
            scratch_shapes=[pltpu.VMEM((tm, h1_pad), f32)],
        ),
        compiler_params=cp_prop,
        cost_estimate=pl.CostEstimate(
            flops=2 * n_pad * n_pad * h1_pad + 2 * n_pad * h1_pad * h2_pad,
            transcendentals=0,
            bytes_accessed=(n_pad * n_pad + n_pad * h1_pad + h1_pad * h2_pad
                            + n_pad * h2_pad) * isz + n_pad * h2_pad * 4),
    )(ap, z0, w2, b2)

    # ---- A @ z1 -> relu -> fc3 -> log_softmax --------------------------------------
    out = pl.pallas_call(
        prop_cls_kernel,
        out_shape=jax.ShapeDtypeStruct((n_pad, c_pad), f32),
        grid_spec=pltpu.PrefetchScalarGridSpec(
            num_scalar_prefetch=0,
            grid=(n_rows, n_k),
            in_specs=[pl.BlockSpec((tm, tk), lambda i, k: (i, k)),
                      pl.BlockSpec((tk, h2_pad), lambda i, k: (k, 0)),
                      pl.BlockSpec((h2_pad, c_pad), lambda i, k: (0, 0)),
                      pl.BlockSpec((1, c_pad), lambda i, k: (0, 0))],
            out_specs=pl.BlockSpec((tm, c_pad), lambda i, k: (i, 0)),
            scratch_shapes=[pltpu.VMEM((tm, h2_pad), f32)],
        ),
        compiler_params=cp_prop,
        cost_estimate=pl.CostEstimate(
            flops=2 * n_pad * n_pad * h2_pad + 2 * n_pad * h2_pad * c_pad,
            transcendentals=n_pad * c_pad + n_pad,
            bytes_accessed=(n_pad * n_pad + n_pad * h2_pad + h2_pad * c_pad) * isz
                           + n_pad * c_pad * 4),
    )(ap, z1, w3, b3)

    log_probs = out[:n, :c]
    if return_hidden_features:
        return log_probs, hid[:n, :h2]
    return log_probs


def init_params(key, n_feat, n_hidden_1, n_hidden_2, n_class):
    ks = jax.random.split(key, 6)

    def linear_init(kw, kb, fan_in, fan_out):
        bound = 1.0 / jnp.sqrt(fan_in)
        w = jax.random.uniform(kw, (fan_out, fan_in), jnp.float32, -bound, bound)
        b = jax.random.uniform(kb, (fan_out,), jnp.float32, -bound, bound)
        return w, b

    w1, b1 = linear_init(ks[0], ks[1], n_feat, n_hidden_1)
    w2, b2 = linear_init(ks[2], ks[3], n_hidden_1, n_hidden_2)
    w3, b3 = linear_init(ks[4], ks[5], n_hidden_2, n_class)
    return {"w1": w1, "b1": b1, "w2": w2, "b2": b2, "w3": w3, "b3": b3}


if __name__ == "__main__":
    key = jax.random.PRNGKey(0)
    k_x, k_adj, k_p = jax.random.split(key, 3)

    N, n_feat, n_hidden_1, n_hidden_2, n_class = 8, 16, 32, 32, 8

    x_in = jax.random.normal(k_x, (N, n_feat), jnp.float32)

    # Symmetric row-normalized adjacency with self-loops (typical GCN preprocessing).
    a = (jax.random.uniform(k_adj, (N, N)) > 0.5).astype(jnp.float32)
    a = jnp.maximum(a, a.T) + jnp.eye(N, dtype=jnp.float32)
    adj = a / jnp.sum(a, axis=1, keepdims=True)

    params = init_params(k_p, n_feat, n_hidden_1, n_hidden_2, n_class)

    fwd = jax.jit(lambda x, ad, p: gnn_forward(x, ad, p, return_hidden_features=True))
    log_probs, hidden = fwd(x_in, adj, params)
    jax.block_until_ready((log_probs, hidden))

    # Pure-JAX reference mirroring the kernel's bf16-operand / f32-accumulate path
    # (eval-mode dropout = identity).
    cdt = jnp.bfloat16
    xr, ar = x_in.astype(cdt), adj.astype(cdt)
    w1r, w2r, w3r = (params["w1"].T.astype(cdt), params["w2"].T.astype(cdt),
                     params["w3"].T.astype(cdt))
    z0 = (jnp.dot(xr, w1r, preferred_element_type=jnp.float32) + params["b1"]).astype(cdt)
    h0 = jnp.maximum(jnp.dot(ar, z0, preferred_element_type=jnp.float32), 0.0).astype(cdt)
    z1 = jnp.dot(h0, w2r, preferred_element_type=jnp.float32) + params["b2"]
    h1 = jnp.maximum(jnp.dot(ar, z1.astype(cdt), preferred_element_type=jnp.float32),
                     0.0).astype(cdt)
    logits = jnp.dot(h1, w3r, preferred_element_type=jnp.float32) + params["b3"]
    ref_lp = jax.nn.log_softmax(logits, axis=1)

    assert log_probs.shape == (N, n_class) and hidden.shape == (N, n_hidden_2)
    assert bool(jnp.all(jnp.isfinite(log_probs))), "non-finite log-probs"
    assert jnp.allclose(log_probs, ref_lp, atol=2e-2), "log_softmax mismatch"
    assert jnp.allclose(hidden, z1, atol=2e-2), "hidden feature mismatch"

    print("KERNEL_OK")
</pallas_src>

<mosaic_0001>
module attributes {stable_mosaic.version = 11 : i64} {
  func.func @fc_kernel(%arg0: i32, %arg1: memref<128x128xbf16, #tpu.memory_space<vmem>>, %arg2: memref<128x128xbf16, #tpu.memory_space<vmem>>, %arg3: memref<1x128xf32, #tpu.memory_space<vmem>>, %arg4: memref<128x128xbf16, #tpu.memory_space<vmem>>) attributes {dimension_semantics = [#tpu.dimension_semantics<parallel>], iteration_bounds = array<i64: 1>, scalar_prefetch = 0 : i64, scratch_operands = 0 : i64, tpu.core_type = #tpu.core_type<tc>, window_params = [{transform_indices = @transform_0, window_bounds = array<i64: 128, 128>}, {pipeline_mode = #tpu.pipeline_mode<synchronous>, transform_indices = @transform_1, window_bounds = array<i64: 128, 128>}, {pipeline_mode = #tpu.pipeline_mode<synchronous>, transform_indices = @transform_2, window_bounds = array<i64: 1, 128>}, {transform_indices = @transform_3, window_bounds = array<i64: 128, 128>}]} {
    %c0 = arith.constant 0 : index
    %c0_0 = arith.constant 0 : index
    %0 = vector.load %arg1[%c0, %c0_0] : memref<128x128xbf16, #tpu.memory_space<vmem>>, vector<128x128xbf16>
    %c0_1 = arith.constant 0 : index
    %c0_2 = arith.constant 0 : index
    %1 = vector.load %arg2[%c0_1, %c0_2] : memref<128x128xbf16, #tpu.memory_space<vmem>>, vector<128x128xbf16>
    %cst = arith.constant dense<0.000000e+00> : vector<128x128xf32>
    %2 = tpu.matmul %0, %1, %cst {dimension_numbers = #tpu.dot_dimension_numbers<[1], [0], [0], [1], [0, 0, 1, 1], [], []>} : vector<128x128xbf16>, vector<128x128xbf16>, vector<128x128xf32> -> vector<128x128xf32>
    %c0_3 = arith.constant 0 : index
    %c0_4 = arith.constant 0 : index
    %3 = vector.load %arg3[%c0_3, %c0_4] : memref<1x128xf32, #tpu.memory_space<vmem>>, vector<1x128xf32>
    %4 = vector.broadcast %3 : vector<1x128xf32> to vector<128x128xf32>
    %5 = arith.addf %2, %4 : vector<128x128xf32>
    %6 = arith.truncf %5 : vector<128x128xf32> to vector<128x128xbf16>
    %c0_5 = arith.constant 0 : index
    %c0_6 = arith.constant 0 : index
    %7 = vector.load %arg4[%c0_5, %c0_6] : memref<128x128xbf16, #tpu.memory_space<vmem>>, vector<128x128xbf16>
    tpu.vector_store %arg4[%c0_5, %c0_6], %6 {strides = array<i32>} : memref<128x128xbf16, #tpu.memory_space<vmem>>, vector<128x128xbf16>,
    return
  }
  func.func @transform_0(%arg0: i32) -> (i32, i32) {
    %c0_i32 = arith.constant 0 : i32
    %c0_i32_0 = arith.constant 0 : i32
    return %arg0, %c0_i32 : i32, i32
  }
  func.func @transform_1(%arg0: i32) -> (i32, i32) {
    %c0_i32 = arith.constant 0 : i32
    %c0_i32_0 = arith.constant 0 : i32
    %c0_i32_1 = arith.constant 0 : i32
    return %c0_i32, %c0_i32_0 : i32, i32
  }
  func.func @transform_2(%arg0: i32) -> (i32, i32) {
    %c0_i32 = arith.constant 0 : i32
    %c0_i32_0 = arith.constant 0 : i32
    %c0_i32_1 = arith.constant 0 : i32
    return %c0_i32, %c0_i32_0 : i32, i32
  }
  func.func @transform_3(%arg0: i32) -> (i32, i32) {
    %c0_i32 = arith.constant 0 : i32
    %c0_i32_0 = arith.constant 0 : i32
    return %arg0, %c0_i32 : i32, i32
  }
}

module attributes {stable_mosaic.version = 11 : i64} {
  func.func @prop_fc_kernel(%arg0: i32, %arg1: i32, %arg2: memref<128x128xbf16, #tpu.memory_space<vmem>>, %arg3: memref<128x128xbf16, #tpu.memory_space<vmem>>, %arg4: memref<128x128xbf16, #tpu.memory_space<vmem>>, %arg5: memref<1x128xf32, #tpu.memory_space<vmem>>, %arg6: memref<128x128xf32, #tpu.memory_space<vmem>>, %arg7: memref<128x128xbf16, #tpu.memory_space<vmem>>, %arg8: memref<128x128xf32, #tpu.memory_space<vmem>>) attributes {dimension_semantics = [#tpu.dimension_semantics<parallel>, #tpu.dimension_semantics<arbitrary>], iteration_bounds = array<i64: 1, 1>, scalar_prefetch = 0 : i64, scratch_operands = 1 : i64, tpu.core_type = #tpu.core_type<tc>, window_params = [{transform_indices = @transform_0, window_bounds = array<i64: 128, 128>}, {transform_indices = @transform_1, window_bounds = array<i64: 128, 128>}, {pipeline_mode = #tpu.pipeline_mode<synchronous>, transform_indices = @transform_2, window_bounds = array<i64: 128, 128>}, {pipeline_mode = #tpu.pipeline_mode<synchronous>, transform_indices = @transform_3, window_bounds = array<i64: 1, 128>}, {transform_indices = @transform_4, window_bounds = array<i64: 128, 128>}, {transform_indices = @transform_5, window_bounds = array<i64: 128, 128>}]} {
    %c0_i32 = arith.constant 0 : i32
    %0 = arith.cmpi eq, %arg1, %c0_i32 : i32
    %1 = arith.extui %0 : i1 to i32
    %c0_i32_0 = arith.constant 0 : i32
    %2 = arith.cmpi ne, %1, %c0_i32_0 : i32
    scf.if %2 {
      %cst_10 = arith.constant 0.000000e+00 : f32
      %12 = vector.broadcast %cst_10 : f32 to vector<128x128xf32>
      %c0_11 = arith.constant 0 : index
      %c0_12 = arith.constant 0 : index
      %13 = vector.load %arg8[%c0_11, %c0_12] : memref<128x128xf32, #tpu.memory_space<vmem>>, vector<128x128xf32>
      tpu.vector_store %arg8[%c0_11, %c0_12], %12 {strides = array<i32>} : memref<128x128xf32, #tpu.memory_space<vmem>>, vector<128x128xf32>,
    } else {
    }
    %c0 = arith.constant 0 : index
    %c0_1 = arith.constant 0 : index
    %3 = vector.load %arg8[%c0, %c0_1] : memref<128x128xf32, #tpu.memory_space<vmem>>, vector<128x128xf32>
    %c0_2 = arith.constant 0 : index
    %c0_3 = arith.constant 0 : index
    %4 = vector.load %arg2[%c0_2, %c0_3] : memref<128x128xbf16, #tpu.memory_space<vmem>>, vector<128x128xbf16>
    %c0_4 = arith.constant 0 : index
    %c0_5 = arith.constant 0 : index
    %5 = vector.load %arg3[%c0_4, %c0_5] : memref<128x128xbf16, #tpu.memory_space<vmem>>, vector<128x128xbf16>
    %cst = arith.constant dense<0.000000e+00> : vector<128x128xf32>
    %6 = tpu.matmul %4, %5, %cst {dimension_numbers = #tpu.dot_dimension_numbers<[1], [0], [0], [1], [0, 0, 1, 1], [], []>} : vector<128x128xbf16>, vector<128x128xbf16>, vector<128x128xf32> -> vector<128x128xf32>
    %7 = arith.addf %3, %6 : vector<128x128xf32>
    %c0_6 = arith.constant 0 : index
    %c0_7 = arith.constant 0 : index
    %8 = vector.load %arg8[%c0_6, %c0_7] : memref<128x128xf32, #tpu.memory_space<vmem>>, vector<128x128xf32>
    tpu.vector_store %arg8[%c0_6, %c0_7], %7 {strides = array<i32>} : memref<128x128xf32, #tpu.memory_space<vmem>>, vector<128x128xf32>,
    %c0_i32_8 = arith.constant 0 : i32
    %9 = arith.cmpi eq, %arg1, %c0_i32_8 : i32
    %10 = arith.extui %9 : i1 to i32
    %c0_i32_9 = arith.constant 0 : i32
    %11 = arith.cmpi ne, %10, %c0_i32_9 : i32
    scf.if %11 {
      %c0_10 = arith.constant 0 : index
      %c0_11 = arith.constant 0 : index
      %12 = vector.load %arg8[%c0_10, %c0_11] : memref<128x128xf32, #tpu.memory_space<vmem>>, vector<128x128xf32>
      %cst_12 = arith.constant 0.000000e+00 : f32
      %13 = vector.broadcast %cst_12 : f32 to vector<128x128xf32>
      %14 = arith.maximumf %12, %13 : vector<128x128xf32>
      %15 = arith.truncf %14 : vector<128x128xf32> to vector<128x128xbf16>
      %c0_13 = arith.constant 0 : index
      %c0_14 = arith.constant 0 : index
      %16 = vector.load %arg4[%c0_13, %c0_14] : memref<128x128xbf16, #tpu.memory_space<vmem>>, vector<128x128xbf16>
      %cst_15 = arith.constant dense<0.000000e+00> : vector<128x128xf32>
      %17 = tpu.matmul %15, %16, %cst_15 {dimension_numbers = #tpu.dot_dimension_numbers<[1], [0], [0], [1], [0, 0, 1, 1], [], []>} : vector<128x128xbf16>, vector<128x128xbf16>, vector<128x128xf32> -> vector<128x128xf32>
      %c0_16 = arith.constant 0 : index
      %c0_17 = arith.constant 0 : index
      %18 = vector.load %arg5[%c0_16, %c0_17] : memref<1x128xf32, #tpu.memory_space<vmem>>, vector<1x128xf32>
      %19 = vector.broadcast %18 : vector<1x128xf32> to vector<128x128xf32>
      %20 = arith.addf %17, %19 : vector<128x128xf32>
      %c0_18 = arith.constant 0 : index
      %c0_19 = arith.constant 0 : index
      %21 = vector.load %arg6[%c0_18, %c0_19] : memref<128x128xf32, #tpu.memory_space<vmem>>, vector<128x128xf32>
      tpu.vector_store %arg6[%c0_18, %c0_19], %20 {strides = array<i32>} : memref<128x128xf32, #tpu.memory_space<vmem>>, vector<128x128xf32>,
      %22 = arith.truncf %20 : vector<128x128xf32> to vector<128x128xbf16>
      %c0_20 = arith.constant 0 : index
      %c0_21 = arith.constant 0 : index
      %23 = vector.load %arg7[%c0_20, %c0_21] : memref<128x128xbf16, #tpu.memory_space<vmem>>, vector<128x128xbf16>
      tpu.vector_store %arg7[%c0_20, %c0_21], %22 {strides = array<i32>} : memref<128x128xbf16, #tpu.memory_space<vmem>>, vector<128x128xbf16>,
    } else {
    }
    return
  }
  func.func @transform_0(%arg0: i32, %arg1: i32) -> (i32, i32) {
    %c0_i32 = arith.constant 0 : i32
    return %arg0, %arg1 : i32, i32
  }
  func.func @transform_1(%arg0: i32, %arg1: i32) -> (i32, i32) {
    %c0_i32 = arith.constant 0 : i32
    %c0_i32_0 = arith.constant 0 : i32
    return %arg1, %c0_i32 : i32, i32
  }
  func.func @transform_2(%arg0: i32, %arg1: i32) -> (i32, i32) {
    %c0_i32 = arith.constant 0 : i32
    %c0_i32_0 = arith.constant 0 : i32
    %c0_i32_1 = arith.constant 0 : i32
    return %c0_i32, %c0_i32_0 : i32, i32
  }
  func.func @transform_3(%arg0: i32, %arg1: i32) -> (i32, i32) {
    %c0_i32 = arith.constant 0 : i32
    %c0_i32_0 = arith.constant 0 : i32
    %c0_i32_1 = arith.constant 0 : i32
    return %c0_i32, %c0_i32_0 : i32, i32
  }
  func.func @transform_4(%arg0: i32, %arg1: i32) -> (i32, i32) {
    %c0_i32 = arith.constant 0 : i32
    %c0_i32_0 = arith.constant 0 : i32
    return %arg0, %c0_i32 : i32, i32
  }
  func.func @transform_5(%arg0: i32, %arg1: i32) -> (i32, i32) {
    %c0_i32 = arith.constant 0 : i32
    %c0_i32_0 = arith.constant 0 : i32
    return %arg0, %c0_i32 : i32, i32
  }
}

module attributes {stable_mosaic.version = 11 : i64} {
  func.func @prop_cls_kernel(%arg0: i32, %arg1: i32, %arg2: memref<128x128xbf16, #tpu.memory_space<vmem>>, %arg3: memref<128x128xbf16, #tpu.memory_space<vmem>>, %arg4: memref<128x128xbf16, #tpu.memory_space<vmem>>, %arg5: memref<1x128xf32, #tpu.memory_space<vmem>>, %arg6: memref<128x128xf32, #tpu.memory_space<vmem>>, %arg7: memref<128x128xf32, #tpu.memory_space<vmem>>) attributes {dimension_semantics = [#tpu.dimension_semantics<parallel>, #tpu.dimension_semantics<arbitrary>], iteration_bounds = array<i64: 1, 1>, scalar_prefetch = 0 : i64, scratch_operands = 1 : i64, tpu.core_type = #tpu.core_type<tc>, window_params = [{transform_indices = @transform_0, window_bounds = array<i64: 128, 128>}, {transform_indices = @transform_1, window_bounds = array<i64: 128, 128>}, {pipeline_mode = #tpu.pipeline_mode<synchronous>, transform_indices = @transform_2, window_bounds = array<i64: 128, 128>}, {pipeline_mode = #tpu.pipeline_mode<synchronous>, transform_indices = @transform_3, window_bounds = array<i64: 1, 128>}, {transform_indices = @transform_4, window_bounds = array<i64: 128, 128>}]} {
    %c0_i32 = arith.constant 0 : i32
    %0 = arith.cmpi eq, %arg1, %c0_i32 : i32
    %1 = arith.extui %0 : i1 to i32
    %c0_i32_0 = arith.constant 0 : i32
    %2 = arith.cmpi ne, %1, %c0_i32_0 : i32
    scf.if %2 {
      %cst_10 = arith.constant 0.000000e+00 : f32
      %12 = vector.broadcast %cst_10 : f32 to vector<128x128xf32>
      %c0_11 = arith.constant 0 : index
      %c0_12 = arith.constant 0 : index
      %13 = vector.load %arg7[%c0_11, %c0_12] : memref<128x128xf32, #tpu.memory_space<vmem>>, vector<128x128xf32>
      tpu.vector_store %arg7[%c0_11, %c0_12], %12 {strides = array<i32>} : memref<128x128xf32, #tpu.memory_space<vmem>>, vector<128x128xf32>,
    } else {
    }
    %c0 = arith.constant 0 : index
    %c0_1 = arith.constant 0 : index
    %3 = vector.load %arg7[%c0, %c0_1] : memref<128x128xf32, #tpu.memory_space<vmem>>, vector<128x128xf32>
    %c0_2 = arith.constant 0 : index
    %c0_3 = arith.constant 0 : index
    %4 = vector.load %arg2[%c0_2, %c0_3] : memref<128x128xbf16, #tpu.memory_space<vmem>>, vector<128x128xbf16>
    %c0_4 = arith.constant 0 : index
    %c0_5 = arith.constant 0 : index
    %5 = vector.load %arg3[%c0_4, %c0_5] : memref<128x128xbf16, #tpu.memory_space<vmem>>, vector<128x128xbf16>
    %cst = arith.constant dense<0.000000e+00> : vector<128x128xf32>
    %6 = tpu.matmul %4, %5, %cst {dimension_numbers = #tpu.dot_dimension_numbers<[1], [0], [0], [1], [0, 0, 1, 1], [], []>} : vector<128x128xbf16>, vector<128x128xbf16>, vector<128x128xf32> -> vector<128x128xf32>
    %7 = arith.addf %3, %6 : vector<128x128xf32>
    %c0_6 = arith.constant 0 : index
    %c0_7 = arith.constant 0 : index
    %8 = vector.load %arg7[%c0_6, %c0_7] : memref<128x128xf32, #tpu.memory_space<vmem>>, vector<128x128xf32>
    tpu.vector_store %arg7[%c0_6, %c0_7], %7 {strides = array<i32>} : memref<128x128xf32, #tpu.memory_space<vmem>>, vector<128x128xf32>,
    %c0_i32_8 = arith.constant 0 : i32
    %9 = arith.cmpi eq, %arg1, %c0_i32_8 : i32
    %10 = arith.extui %9 : i1 to i32
    %c0_i32_9 = arith.constant 0 : i32
    %11 = arith.cmpi ne, %10, %c0_i32_9 : i32
    scf.if %11 {
      %c0_10 = arith.constant 0 : index
      %c0_11 = arith.constant 0 : index
      %12 = vector.load %arg7[%c0_10, %c0_11] : memref<128x128xf32, #tpu.memory_space<vmem>>, vector<128x128xf32>
      %cst_12 = arith.constant 0.000000e+00 : f32
      %13 = vector.broadcast %cst_12 : f32 to vector<128x128xf32>
      %14 = arith.maximumf %12, %13 : vector<128x128xf32>
      %15 = arith.truncf %14 : vector<128x128xf32> to vector<128x128xbf16>
      %c0_13 = arith.constant 0 : index
      %c0_14 = arith.constant 0 : index
      %16 = vector.load %arg4[%c0_13, %c0_14] : memref<128x128xbf16, #tpu.memory_space<vmem>>, vector<128x128xbf16>
      %cst_15 = arith.constant dense<0.000000e+00> : vector<128x128xf32>
      %17 = tpu.matmul %15, %16, %cst_15 {dimension_numbers = #tpu.dot_dimension_numbers<[1], [0], [0], [1], [0, 0, 1, 1], [], []>} : vector<128x128xbf16>, vector<128x128xbf16>, vector<128x128xf32> -> vector<128x128xf32>
      %c0_16 = arith.constant 0 : index
      %c0_17 = arith.constant 0 : index
      %18 = vector.load %arg5[%c0_16, %c0_17] : memref<1x128xf32, #tpu.memory_space<vmem>>, vector<1x128xf32>
      %19 = vector.broadcast %18 : vector<1x128xf32> to vector<128x128xf32>
      %20 = arith.addf %17, %19 : vector<128x128xf32>
      %cst_18 = arith.constant dense<0xFF800000> : vector<128xf32>
      %21 = vector.multi_reduction <maximumf>, %20, %cst_18 [1] : vector<128x128xf32> to vector<128xf32>
      %22 = vector.shape_cast %21 : vector<128xf32> to vector<128x1xf32>
      %23 = vector.broadcast %22 : vector<128x1xf32> to vector<128x128xf32>
      %24 = arith.subf %20, %23 : vector<128x128xf32>
      %25 = math.exp %24 : vector<128x128xf32>
      %cst_19 = arith.constant dense<0.000000e+00> : vector<128xf32>
      %26 = vector.multi_reduction <add>, %25, %cst_19 [1] : vector<128x128xf32> to vector<128xf32>
      %27 = vector.shape_cast %26 : vector<128xf32> to vector<128x1xf32>
      %28 = math.log %27 : vector<128x1xf32>
      %29 = vector.broadcast %28 : vector<128x1xf32> to vector<128x128xf32>
      %30 = arith.subf %24, %29 : vector<128x128xf32>
      %c0_20 = arith.constant 0 : index
      %c0_21 = arith.constant 0 : index
      %31 = vector.load %arg6[%c0_20, %c0_21] : memref<128x128xf32, #tpu.memory_space<vmem>>, vector<128x128xf32>
      tpu.vector_store %arg6[%c0_20, %c0_21], %30 {strides = array<i32>} : memref<128x128xf32, #tpu.memory_space<vmem>>, vector<128x128xf32>,
    } else {
    }
    return
  }
  func.func @transform_0(%arg0: i32, %arg1: i32) -> (i32, i32) {
    %c0_i32 = arith.constant 0 : i32
    return %arg0, %arg1 : i32, i32
  }
  func.func @transform_1(%arg0: i32, %arg1: i32) -> (i32, i32) {
    %c0_i32 = arith.constant 0 : i32
    %c0_i32_0 = arith.constant 0 : i32
    return %arg1, %c0_i32 : i32, i32
  }
  func.func @transform_2(%arg0: i32, %arg1: i32) -> (i32, i32) {
    %c0_i32 = arith.constant 0 : i32
    %c0_i32_0 = arith.constant 0 : i32
    %c0_i32_1 = arith.constant 0 : i32
    return %c0_i32, %c0_i32_0 : i32, i32
  }
  func.func @transform_3(%arg0: i32, %arg1: i32) -> (i32, i32) {
    %c0_i32 = arith.constant 0 : i32
    %c0_i32_0 = arith.constant 0 : i32
    %c0_i32_1 = arith.constant 0 : i32
    return %c0_i32, %c0_i32_0 : i32, i32
  }
  func.func @transform_4(%arg0: i32, %arg1: i32) -> (i32, i32) {
    %c0_i32 = arith.constant 0 : i32
    %c0_i32_0 = arith.constant 0 : i32
    return %arg0, %c0_i32 : i32, i32
  }
}

</mosaic_0001>

<llo_original>
// kernel: _lambda_.3
$region0: #{_lambda_.3}
  #allocation0 [shape = 'u32[]', space=smem, size = 0x4, offset = 0x4, fixed_abs, tag = 'smem constant byte address 0x4 - core index']
  #allocation1 [shape = 'u32[144,128]{1,0:T(1,128)}', space=vmem, size = 0x12000, scoped, tag = 'internal scratch']
  %s0 = inlined_call_operand.vmem [shape: bf16[128,128], index: 0, kind: input, shape index: {}]
  %s1 = inlined_call_operand.vmem [shape: bf16[128,128], index: 1, kind: input, shape index: {}]
  %s2 = inlined_call_operand.vmem [shape: f32[1,128], index: 2, kind: input, shape index: {}]
  %s3 = inlined_call_operand.vmem [shape: bf16[128,128], index: 3, kind: output, shape index: {}]
  %s4 = sld [smem:[#allocation0]]
  $region22: #{_lambda_.3} parent=0
    _
  %s6 = ssub.s32 1, %s4
  %s7 = scalar_select 0, %s6, %s4
  // Predicated region
  $region2: #{_lambda_.3} parent=0 // pred_check
    _
  $region3: #{_lambda_.3} parent=0 // pred_check_branch
    %9 = sbr.rel (0) target = $region5
  $region4: #{_lambda_.3} parent=0 // pred_region
    _
  $region5: #{_lambda_.3} parent=0 // pred_fallthru
    _
  // Predicated region
  $region6: #{_lambda_.3} parent=0 // pred_check
    _
  $region7: #{_lambda_.3} parent=0 // pred_check_branch
    %11 = sbr.rel (0) target = $region9
  $region8: #{_lambda_.3} parent=0 // pred_region
    _
  $region9: #{_lambda_.3} parent=0 // pred_fallthru
    _
  // Predicated region
  $region10: #{_lambda_.3} parent=0 // pred_check
    _
  $region11: #{_lambda_.3} parent=0 // pred_check_branch
    %13 = sbr.rel (0) target = $region13
  $region12: #{_lambda_.3} parent=0 // pred_region
    _
  $region13: #{_lambda_.3} parent=0 // pred_fallthru
    _
  %v15 = vld [vmem:[%s0] sm:$0xf]
  %v16 = vld [vmem:[%s0 + $0x4] sm:$0xf]
  %v17 = vld [vmem:[%s0 + $0x8] sm:$0xf]
  %v18 = vld [vmem:[%s0 + $0xc] sm:$0xf]
  %v19 = vld [vmem:[%s0 + $0x10] sm:$0xf]
  %v20 = vld [vmem:[%s0 + $0x14] sm:$0xf]
  %v21 = vld [vmem:[%s0 + $0x18] sm:$0xf]
  %v22 = vld [vmem:[%s0 + $0x1c] sm:$0xf]
  %v23 = vld [vmem:[%s0 + $0x20] sm:$0xf]
  %v24 = vld [vmem:[%s0 + $0x24] sm:$0xf]
  %v25 = vld [vmem:[%s0 + $0x28] sm:$0xf]
  %v26 = vld [vmem:[%s0 + $0x2c] sm:$0xf]
  %v27 = vld [vmem:[%s0 + $0x30] sm:$0xf]
  %v28 = vld [vmem:[%s0 + $0x34] sm:$0xf]
  %v29 = vld [vmem:[%s0 + $0x38] sm:$0xf]
  %v30 = vld [vmem:[%s0 + $0x3c] sm:$0xf]
  %v31 = vld [vmem:[%s1] sm:$0xf]
  %v32 = vld [vmem:[%s1 + $0x4] sm:$0xf]
  %v33 = vld [vmem:[%s1 + $0x8] sm:$0xf]
  %v34 = vld [vmem:[%s1 + $0xc] sm:$0xf]
  %v35 = vld [vmem:[%s1 + $0x10] sm:$0xf]
  %v36 = vld [vmem:[%s1 + $0x14] sm:$0xf]
  %v37 = vld [vmem:[%s1 + $0x18] sm:$0xf]
  %v38 = vld [vmem:[%s1 + $0x1c] sm:$0xf]
  %v39 = vld [vmem:[%s1 + $0x20] sm:$0xf]
  %v40 = vld [vmem:[%s1 + $0x24] sm:$0xf]
  %v41 = vld [vmem:[%s1 + $0x28] sm:$0xf]
  %v42 = vld [vmem:[%s1 + $0x2c] sm:$0xf]
  %v43 = vld [vmem:[%s1 + $0x30] sm:$0xf]
  %v44 = vld [vmem:[%s1 + $0x34] sm:$0xf]
  %v45 = vld [vmem:[%s1 + $0x38] sm:$0xf]
  %v46 = vld [vmem:[%s1 + $0x3c] sm:$0xf]
  %v47 = vld [vmem:[%s2] sm:$0x1]
  %v49 = vlaneseq
  %v50 = vshrl.u32 %v49, 7
  %v51 = vsub.s32 0, %v50
  %v52 = vrot.slane %v47, %v51
  %v70 = vunpack.c.l.b16 %v15
  %v71 = vunpack.c.l.b16 %v16
  %v72 = vunpack.c.l.b16 %v17
  %v73 = vunpack.c.l.b16 %v18
  %v74 = vunpack.c.l.b16 %v19
  %v75 = vunpack.c.l.b16 %v20
  %v76 = vunpack.c.l.b16 %v21
  %v77 = vunpack.c.l.b16 %v22
  %v78 = vunpack.c.l.b16 %v23
  %v79 = vunpack.c.l.b16 %v24
  %v80 = vunpack.c.l.b16 %v25
  %v81 = vunpack.c.l.b16 %v26
  %v82 = vunpack.c.l.b16 %v27
  %v83 = vunpack.c.l.b16 %v28
  %v84 = vunpack.c.l.b16 %v29
  %v85 = vunpack.c.l.b16 %v30
  %v86 = vpack.c.b16 %v71, %v70
  %v87 = vpack.c.b16 %v73, %v72
  %v88 = vpack.c.b16 %v75, %v74
  %v89 = vpack.c.b16 %v77, %v76
  %v90 = vpack.c.b16 %v79, %v78
  %v91 = vpack.c.b16 %v81, %v80
  %v92 = vpack.c.b16 %v83, %v82
  %v93 = vpack.c.b16 %v85, %v84
  %v118 = vunpack.c.l.b16 %v31
  %v119 = vunpack.c.l.b16 %v32
  %v120 = vunpack.c.l.b16 %v33
  %v121 = vunpack.c.l.b16 %v34
  %v122 = vunpack.c.l.b16 %v35
  %v123 = vunpack.c.l.b16 %v36
  %v124 = vunpack.c.l.b16 %v37
  %v125 = vunpack.c.l.b16 %v38
  %v126 = vunpack.c.l.b16 %v39
  %v127 = vunpack.c.l.b16 %v40
  %v128 = vunpack.c.l.b16 %v41
  %v129 = vunpack.c.l.b16 %v42
  %v130 = vunpack.c.l.b16 %v43
  %v131 = vunpack.c.l.b16 %v44
  %v132 = vunpack.c.l.b16 %v45
  %v133 = vunpack.c.l.b16 %v46
  %v134 = vpack.c.b16 %v119, %v118
  %v135 = vpack.c.b16 %v121, %v120
  %v136 = vpack.c.b16 %v123, %v122
  %v137 = vpack.c.b16 %v125, %v124
  %v138 = vpack.c.b16 %v127, %v126
  %v139 = vpack.c.b16 %v129, %v128
  %v140 = vpack.c.b16 %v131, %v130
  %v141 = vpack.c.b16 %v133, %v132
  %150 = vmatprep.subr.bf16.mxu0 0
  %151 = vmatpush1.bf16.msra.mxu0 %v134
  %152 = vmatprep.subr.bf16.mxu0 0
  %153 = vmatpush1.bf16.msra.mxu0 %v135
  %154 = vmatprep.subr.bf16.mxu0 0
  %155 = vmatpush1.bf16.msra.mxu0 %v136
  %156 = vmatprep.subr.bf16.mxu0 0
  %157 = vmatpush1.bf16.msra.mxu0 %v137
  %158 = vmatprep.subr.bf16.mxu0 0
  %159 = vmatpush1.bf16.msra.mxu0 %v138
  %160 = vmatprep.subr.bf16.mxu0 0
  %161 = vmatpush1.bf16.msra.mxu0 %v139
  %162 = vmatprep.subr.bf16.mxu0 0
  %163 = vmatpush1.bf16.msra.mxu0 %v140
  %164 = vmatprep.subr.bf16.mxu0 0
  %165 = vmatpush1.bf16.msra.mxu0 %v141
  %166 = vmatprep.subr.bf16.mxu0 0
  %167 = vmatpush1.bf16.msra.mxu0 0
  %168 = vmatprep.subr.bf16.mxu0 0
  %169 = vmatpush1.bf16.msra.mxu0 0
  %170 = vmatprep.subr.bf16.mxu0 0
  %171 = vmatpush1.bf16.msra.mxu0 0
  %172 = vmatprep.subr.bf16.mxu0 0
  %173 = vmatpush1.bf16.msra.mxu0 0
  %174 = vmatprep.subr.bf16.mxu0 0
  %175 = vmatpush1.bf16.msra.mxu0 0
  %176 = vmatprep.subr.bf16.mxu0 0
  %177 = vmatpush1.bf16.msra.mxu0 0
  %178 = vmatprep.subr.bf16.mxu0 0
  %179 = vmatpush1.bf16.msra.mxu0 0
  %180 = vmatprep.subr.bf16.mxu0 0
  %181 = vmatpush1.bf16.msra.mxu0 0
  %182 = vmatprep.mubr.bf16.mxu0 0
  %183 = vmatmul.mubr.bf16.gmra.mrb[0].mxu0 %v86
  %v184 = vpop.f32.mrb[0].mxu0
  %v185 = vadd.f32 %v52, %v184
  %v186 = vpop.f32.mrb[0].mxu0
  %v187 = vpop.f32.mrb[0].mxu0
  %v188 = vadd.f32 %v52, %v187
  %v189 = vpop.f32.mrb[0].mxu0
  %190 = vmatprep.mubr.bf16.mxu0 0
  %191 = vmatmul.mubr.bf16.gmra.mrb[0].mxu0 %v87
  %v192 = vpop.f32.mrb[0].mxu0
  %v193 = vadd.f32 %v52, %v192
  %v194 = vpop.f32.mrb[0].mxu0
  %v195 = vpop.f32.mrb[0].mxu0
  %v196 = vadd.f32 %v52, %v195
  %v197 = vpop.f32.mrb[0].mxu0
  %198 = vmatprep.mubr.bf16.mxu0 0
  %199 = vmatmul.mubr.bf16.gmra.mrb[0].mxu0 %v88
  %v200 = vpop.f32.mrb[0].mxu0
  %v201 = vadd.f32 %v52, %v200
  %v202 = vpop.f32.mrb[0].mxu0
  %v203 = vpop.f32.mrb[0].mxu0
  %v204 = vadd.f32 %v52, %v203
  %v205 = vpop.f32.mrb[0].mxu0
  %206 = vmatprep.mubr.bf16.mxu0 0
  %207 = vmatmul.mubr.bf16.gmra.mrb[0].mxu0 %v89
  %v208 = vpop.f32.mrb[0].mxu0
  %v209 = vadd.f32 %v52, %v208
  %v210 = vpop.f32.mrb[0].mxu0
  %v211 = vpop.f32.mrb[0].mxu0
  %v212 = vadd.f32 %v52, %v211
  %v213 = vpop.f32.mrb[0].mxu0
  %214 = vmatprep.mubr.bf16.mxu0 0
  %215 = vmatmul.mubr.bf16.gmra.mrb[0].mxu0 %v90
  %v216 = vpop.f32.mrb[0].mxu0
  %v217 = vadd.f32 %v52, %v216
  %v218 = vpop.f32.mrb[0].mxu0
  %v219 = vpop.f32.mrb[0].mxu0
  %v220 = vadd.f32 %v52, %v219
  %v221 = vpop.f32.mrb[0].mxu0
  %222 = vmatprep.mubr.bf16.mxu0 0
  %223 = vmatmul.mubr.bf16.gmra.mrb[0].mxu0 %v91
  %v224 = vpop.f32.mrb[0].mxu0
  %v225 = vadd.f32 %v52, %v224
  %v226 = vpop.f32.mrb[0].mxu0
  %v227 = vpop.f32.mrb[0].mxu0
  %v228 = vadd.f32 %v52, %v227
  %v229 = vpop.f32.mrb[0].mxu0
  %230 = vmatprep.mubr.bf16.mxu0 0
  %231 = vmatmul.mubr.bf16.gmra.mrb[0].mxu0 %v92
  %v232 = vpop.f32.mrb[0].mxu0
  %v233 = vadd.f32 %v52, %v232
  %v234 = vpop.f32.mrb[0].mxu0
  %v235 = vpop.f32.mrb[0].mxu0
  %v236 = vadd.f32 %v52, %v235
  %v237 = vpop.f32.mrb[0].mxu0
  %238 = vmatprep.mubr.bf16.mxu0 0
  %239 = vmatmul.mubr.bf16.gmra.mrb[0].mxu0 %v93
  %v240 = vpop.f32.mrb[0].mxu0
  %v241 = vadd.f32 %v52, %v240
  %v242 = vpop.f32.mrb[0].mxu0
  %v243 = vpop.f32.mrb[0].mxu0
  %v244 = vadd.f32 %v52, %v243
  %v245 = vpop.f32.mrb[0].mxu0
  %246 = vdwg.mxu0
  %v247 = vpack.c.bf16 %v188, %v185
  %v248 = vpack.c.bf16 %v196, %v193
  %v249 = vpack.c.bf16 %v204, %v201
  %v250 = vpack.c.bf16 %v212, %v209
  %v251 = vpack.c.bf16 %v220, %v217
  %v252 = vpack.c.bf16 %v228, %v225
  %v253 = vpack.c.bf16 %v236, %v233
  %v254 = vpack.c.bf16 %v244, %v241
  %v263 = vunpack.c.l.b16 %v247
  %v264 = vunpack.c.h.b16 %v247
  %v265 = vunpack.c.l.b16 %v248
  %v266 = vunpack.c.h.b16 %v248
  %v267 = vunpack.c.l.b16 %v249
  %v268 = vunpack.c.h.b16 %v249
  %v269 = vunpack.c.l.b16 %v250
  %v270 = vunpack.c.h.b16 %v250
  %v271 = vunpack.c.l.b16 %v251
  %v272 = vunpack.c.h.b16 %v251
  %v273 = vunpack.c.l.b16 %v252
  %v274 = vunpack.c.h.b16 %v252
  %v275 = vunpack.c.l.b16 %v253
  %v276 = vunpack.c.h.b16 %v253
  %v277 = vunpack.c.l.b16 %v254
  %v278 = vunpack.c.h.b16 %v254
  %v279 = vpack.c.b16 %v263, %v263
  %v280 = vpack.c.b16 %v264, %v264
  %v281 = vpack.c.b16 %v265, %v265
  %v282 = vpack.c.b16 %v266, %v266
  %v283 = vpack.c.b16 %v267, %v267
  %v284 = vpack.c.b16 %v268, %v268
  %v285 = vpack.c.b16 %v269, %v269
  %v286 = vpack.c.b16 %v270, %v270
  %v287 = vpack.c.b16 %v271, %v271
  %v288 = vpack.c.b16 %v272, %v272
  %v289 = vpack.c.b16 %v273, %v273
  %v290 = vpack.c.b16 %v274, %v274
  %v291 = vpack.c.b16 %v275, %v275
  %v292 = vpack.c.b16 %v276, %v276
  %v293 = vpack.c.b16 %v277, %v277
  %v294 = vpack.c.b16 %v278, %v278
  %311 = vst [vmem:[%s3] sm:$0xf] %v279
  %312 = vst [vmem:[%s3 + $0x4] sm:$0xf] %v280
  %313 = vst [vmem:[%s3 + $0x8] sm:$0xf] %v281
  %314 = vst [vmem:[%s3 + $0xc] sm:$0xf] %v282
  %315 = vst [vmem:[%s3 + $0x10] sm:$0xf] %v283
  %316 = vst [vmem:[%s3 + $0x14] sm:$0xf] %v284
  %317 = vst [vmem:[%s3 + $0x18] sm:$0xf] %v285
  %318 = vst [vmem:[%s3 + $0x1c] sm:$0xf] %v286
  %319 = vst [vmem:[%s3 + $0x20] sm:$0xf] %v287
  %320 = vst [vmem:[%s3 + $0x24] sm:$0xf] %v288
  %321 = vst [vmem:[%s3 + $0x28] sm:$0xf] %v289
  %322 = vst [vmem:[%s3 + $0x2c] sm:$0xf] %v290
  %323 = vst [vmem:[%s3 + $0x30] sm:$0xf] %v291
  %324 = vst [vmem:[%s3 + $0x34] sm:$0xf] %v292
  %325 = vst [vmem:[%s3 + $0x38] sm:$0xf] %v293
  %326 = vst [vmem:[%s3 + $0x3c] sm:$0xf] %v294
  // Predicated region
  $region14: #{_lambda_.3} parent=0 // pred_check
    _
  $region15: #{_lambda_.3} parent=0 // pred_check_branch
    %328 = sbr.rel (0) target = $region17
  $region16: #{_lambda_.3} parent=0 // pred_region
    _
  $region17: #{_lambda_.3} parent=0 // pred_fallthru
    _
  // Predicated region
  $region18: #{_lambda_.3} parent=0 // pred_check
    _
  $region19: #{_lambda_.3} parent=0 // pred_check_branch
    %330 = sbr.rel (0) target = $region21
  $region20: #{_lambda_.3} parent=0 // pred_region
    _
  $region21: #{_lambda_.3} parent=0 // pred_fallthru
    _

// kernel: _lambda_.4
$region0: #{_lambda_.4}
  #allocation0 [shape = 'u32[]', space=smem, size = 0x4, offset = 0x4, fixed_abs, tag = 'smem constant byte address 0x4 - core index']
  #allocation1 [shape = 'u32[144,128]{1,0:T(1,128)}', space=vmem, size = 0x12000, scoped, tag = 'internal scratch']
  #allocation2 [shape = 'f32[128,128]{1,0:T(8,128)}', space=vmem, size = 0x10000, scoped, tag = 'scratch operand']
  %s0 = inlined_call_operand.vmem [shape: bf16[128,128], index: 0, kind: input, shape index: {}]
  %s1 = inlined_call_operand.vmem [shape: bf16[128,128], index: 1, kind: input, shape index: {}]
  %s2 = inlined_call_operand.vmem [shape: bf16[128,128], index: 2, kind: input, shape index: {}]
  %s3 = inlined_call_operand.vmem [shape: f32[1,128], index: 3, kind: input, shape index: {}]
  %s4 = inlined_call_operand.vmem [shape: f32[128,128], index: 4, kind: output, shape index: {0}]
  %s5 = inlined_call_operand.vmem [shape: bf16[128,128], index: 5, kind: output, shape index: {1}]
  %6 = xla_tuple %s4, %s5
  %s7 = sld [smem:[#allocation0]]
  $region42: #{_lambda_.4} parent=0
    _
  %s9 = ssub.s32 1, %s7
  %s10 = scalar_select 0, %s9, %s7
  // Predicated region
  $region2: #{_lambda_.4} parent=0 // pred_check
    _
  $region3: #{_lambda_.4} parent=0 // pred_check_branch
    %12 = sbr.rel (0) target = $region5
  $region4: #{_lambda_.4} parent=0 // pred_region
    _
  $region5: #{_lambda_.4} parent=0 // pred_fallthru
    _
  // Predicated region
  $region6: #{_lambda_.4} parent=0 // pred_check
    _
  $region7: #{_lambda_.4} parent=0 // pred_check_branch
    %14 = sbr.rel (0) target = $region9
  $region8: #{_lambda_.4} parent=0 // pred_region
    _
  $region9: #{_lambda_.4} parent=0 // pred_fallthru
    _
  // Predicated region
  $region10: #{_lambda_.4} parent=0 // pred_check
    _
  $region11: #{_lambda_.4} parent=0 // pred_check_branch
    %16 = sbr.rel (0) target = $region13
  $region12: #{_lambda_.4} parent=0 // pred_region
    _
  $region13: #{_lambda_.4} parent=0 // pred_fallthru
    _
  // Predicated region
  $region14: #{_lambda_.4} parent=0 // pred_check
    _
  $region15: #{_lambda_.4} parent=0 // pred_check_branch
    %18 = sbr.rel (0) target = $region17
  $region16: #{_lambda_.4} parent=0 // pred_region
    _
  $region17: #{_lambda_.4} parent=0 // pred_fallthru
    _
  %p20 = scmp.eq.s32.totalorder 0, 0
  // Predicated region
  $region18: #{_lambda_.4} parent=0 // pred_check
    %p21 = pneg %p20
  $region19: #{_lambda_.4} parent=0 // pred_check_branch
    %23 = sbr.rel (%p21) target = $region21
  $region20: #{_lambda_.4} parent=0 // pred_region
    %24 = vst [vmem:[#allocation2] sm:$0xff] 0.0
    %25 = vst [vmem:[#allocation2 + $0x8] sm:$0xff] 0.0
    %26 = vst [vmem:[#allocation2 + $0x10] sm:$0xff] 0.0
    %27 = vst [vmem:[#allocation2 + $0x18] sm:$0xff] 0.0
    %28 = vst [vmem:[#allocation2 + $0x20] sm:$0xff] 0.0
    %29 = vst [vmem:[#allocation2 + $0x28] sm:$0xff] 0.0
    %30 = vst [vmem:[#allocation2 + $0x30] sm:$0xff] 0.0
    %31 = vst [vmem:[#allocation2 + $0x38] sm:$0xff] 0.0
    %32 = vst [vmem:[#allocation2 + $0x40] sm:$0xff] 0.0
    %33 = vst [vmem:[#allocation2 + $0x48] sm:$0xff] 0.0
    %34 = vst [vmem:[#allocation2 + $0x50] sm:$0xff] 0.0
    %35 = vst [vmem:[#allocation2 + $0x58] sm:$0xff] 0.0
    %36 = vst [vmem:[#allocation2 + $0x60] sm:$0xff] 0.0
    %37 = vst [vmem:[#allocation2 + $0x68] sm:$0xff] 0.0
    %38 = vst [vmem:[#allocation2 + $0x70] sm:$0xff] 0.0
    %39 = vst [vmem:[#allocation2 + $0x78] sm:$0xff] 0.0
  $region21: #{_lambda_.4} parent=0 // pred_fallthru
    _
  %v40 = vld [vmem:[#allocation2] sm:$0xff]
  %v41 = vld [vmem:[#allocation2 + $0x8] sm:$0xff]
  %v42 = vld [vmem:[#allocation2 + $0x10] sm:$0xff]
  %v43 = vld [vmem:[#allocation2 + $0x18] sm:$0xff]
  %v44 = vld [vmem:[#allocation2 + $0x20] sm:$0xff]
  %v45 = vld [vmem:[#allocation2 + $0x28] sm:$0xff]
  %v46 = vld [vmem:[#allocation2 + $0x30] sm:$0xff]
  %v47 = vld [vmem:[#allocation2 + $0x38] sm:$0xff]
  %v48 = vld [vmem:[#allocation2 + $0x40] sm:$0xff]
  %v49 = vld [vmem:[#allocation2 + $0x48] sm:$0xff]
  %v50 = vld [vmem:[#allocation2 + $0x50] sm:$0xff]
  %v51 = vld [vmem:[#allocation2 + $0x58] sm:$0xff]
  %v52 = vld [vmem:[#allocation2 + $0x60] sm:$0xff]
  %v53 = vld [vmem:[#allocation2 + $0x68] sm:$0xff]
  %v54 = vld [vmem:[#allocation2 + $0x70] sm:$0xff]
  %v55 = vld [vmem:[#allocation2 + $0x78] sm:$0xff]
  %v56 = vld [vmem:[%s0] sm:$0xf]
  %v57 = vld [vmem:[%s0 + $0x4] sm:$0xf]
  %v58 = vld [vmem:[%s0 + $0x8] sm:$0xf]
  %v59 = vld [vmem:[%s0 + $0xc] sm:$0xf]
  %v60 = vld [vmem:[%s0 + $0x10] sm:$0xf]
  %v61 = vld [vmem:[%s0 + $0x14] sm:$0xf]
  %v62 = vld [vmem:[%s0 + $0x18] sm:$0xf]
  %v63 = vld [vmem:[%s0 + $0x1c] sm:$0xf]
  %v64 = vld [vmem:[%s0 + $0x20] sm:$0xf]
  %v65 = vld [vmem:[%s0 + $0x24] sm:$0xf]
  %v66 = vld [vmem:[%s0 + $0x28] sm:$0xf]
  %v67 = vld [vmem:[%s0 + $0x2c] sm:$0xf]
  %v68 = vld [vmem:[%s0 + $0x30] sm:$0xf]
  %v69 = vld [vmem:[%s0 + $0x34] sm:$0xf]
  %v70 = vld [vmem:[%s0 + $0x38] sm:$0xf]
  %v71 = vld [vmem:[%s0 + $0x3c] sm:$0xf]
  %v72 = vld [vmem:[%s1] sm:$0xf]
  %v73 = vld [vmem:[%s1 + $0x4] sm:$0xf]
  %v74 = vld [vmem:[%s1 + $0x8] sm:$0xf]
  %v75 = vld [vmem:[%s1 + $0xc] sm:$0xf]
  %v76 = vld [vmem:[%s1 + $0x10] sm:$0xf]
  %v77 = vld [vmem:[%s1 + $0x14] sm:$0xf]
  %v78 = vld [vmem:[%s1 + $0x18] sm:$0xf]
  %v79 = vld [vmem:[%s1 + $0x1c] sm:$0xf]
  %v80 = vld [vmem:[%s1 + $0x20] sm:$0xf]
  %v81 = vld [vmem:[%s1 + $0x24] sm:$0xf]
  %v82 = vld [vmem:[%s1 + $0x28] sm:$0xf]
  %v83 = vld [vmem:[%s1 + $0x2c] sm:$0xf]
  %v84 = vld [vmem:[%s1 + $0x30] sm:$0xf]
  %v85 = vld [vmem:[%s1 + $0x34] sm:$0xf]
  %v86 = vld [vmem:[%s1 + $0x38] sm:$0xf]
  %v87 = vld [vmem:[%s1 + $0x3c] sm:$0xf]
  %v104 = vunpack.c.l.b16 %v56
  %v105 = vunpack.c.l.b16 %v57
  %v106 = vunpack.c.l.b16 %v58
  %v107 = vunpack.c.l.b16 %v59
  %v108 = vunpack.c.l.b16 %v60
  %v109 = vunpack.c.l.b16 %v61
  %v110 = vunpack.c.l.b16 %v62
  %v111 = vunpack.c.l.b16 %v63
  %v112 = vunpack.c.l.b16 %v64
  %v113 = vunpack.c.l.b16 %v65
  %v114 = vunpack.c.l.b16 %v66
  %v115 = vunpack.c.l.b16 %v67
  %v116 = vunpack.c.l.b16 %v68
  %v117 = vunpack.c.l.b16 %v69
  %v118 = vunpack.c.l.b16 %v70
  %v119 = vunpack.c.l.b16 %v71
  %v120 = vpack.c.b16 %v105, %v104
  %v121 = vpack.c.b16 %v107, %v106
  %v122 = vpack.c.b16 %v109, %v108
  %v123 = vpack.c.b16 %v111, %v110
  %v124 = vpack.c.b16 %v113, %v112
  %v125 = vpack.c.b16 %v115, %v114
  %v126 = vpack.c.b16 %v117, %v116
  %v127 = vpack.c.b16 %v119, %v118
  %v152 = vunpack.c.l.b16 %v72
  %v153 = vunpack.c.l.b16 %v73
  %v154 = vunpack.c.l.b16 %v74
  %v155 = vunpack.c.l.b16 %v75
  %v156 = vunpack.c.l.b16 %v76
  %v157 = vunpack.c.l.b16 %v77
  %v158 = vunpack.c.l.b16 %v78
  %v159 = vunpack.c.l.b16 %v79
  %v160 = vunpack.c.l.b16 %v80
  %v161 = vunpack.c.l.b16 %v81
  %v162 = vunpack.c.l.b16 %v82
  %v163 = vunpack.c.l.b16 %v83
  %v164 = vunpack.c.l.b16 %v84
  %v165 = vunpack.c.l.b16 %v85
  %v166 = vunpack.c.l.b16 %v86
  %v167 = vunpack.c.l.b16 %v87
  %v168 = vpack.c.b16 %v153, %v152
  %v169 = vpack.c.b16 %v155, %v154
  %v170 = vpack.c.b16 %v157, %v156
  %v171 = vpack.c.b16 %v159, %v158
  %v172 = vpack.c.b16 %v161, %v160
  %v173 = vpack.c.b16 %v163, %v162
  %v174 = vpack.c.b16 %v165, %v164
  %v175 = vpack.c.b16 %v167, %v166
  %184 = vmatprep.subr.bf16.mxu0 0
  %185 = vmatpush1.bf16.msra.mxu0 %v168
  %186 = vmatprep.subr.bf16.mxu0 0
  %187 = vmatpush1.bf16.msra.mxu0 %v169
  %188 = vmatprep.subr.bf16.mxu0 0
  %189 = vmatpush1.bf16.msra.mxu0 %v170
  %190 = vmatprep.subr.bf16.mxu0 0
  %191 = vmatpush1.bf16.msra.mxu0 %v171
  %192 = vmatprep.subr.bf16.mxu0 0
  %193 = vmatpush1.bf16.msra.mxu0 %v172
  %194 = vmatprep.subr.bf16.mxu0 0
  %195 = vmatpush1.bf16.msra.mxu0 %v173
  %196 = vmatprep.subr.bf16.mxu0 0
  %197 = vmatpush1.bf16.msra.mxu0 %v174
  %198 = vmatprep.subr.bf16.mxu0 0
  %199 = vmatpush1.bf16.msra.mxu0 %v175
  %200 = vmatprep.subr.bf16.mxu0 0
  %201 = vmatpush1.bf16.msra.mxu0 0
  %202 = vmatprep.subr.bf16.mxu0 0
  %203 = vmatpush1.bf16.msra.mxu0 0
  %204 = vmatprep.subr.bf16.mxu0 0
  %205 = vmatpush1.bf16.msra.mxu0 0
  %206 = vmatprep.subr.bf16.mxu0 0
  %207 = vmatpush1.bf16.msra.mxu0 0
  %208 = vmatprep.subr.bf16.mxu0 0
  %209 = vmatpush1.bf16.msra.mxu0 0
  %210 = vmatprep.subr.bf16.mxu0 0
  %211 = vmatpush1.bf16.msra.mxu0 0
  %212 = vmatprep.subr.bf16.mxu0 0
  %213 = vmatpush1.bf16.msra.mxu0 0
  %214 = vmatprep.subr.bf16.mxu0 0
  %215 = vmatpush1.bf16.msra.mxu0 0
  %216 = vmatprep.mubr.bf16.mxu0 0
  %217 = vmatmul.mubr.bf16.gmra.mrb[0].mxu0 %v120
  %v218 = vpop.f32.mrb[0].mxu0
  %v219 = vadd.f32 0.0, %v218
  %v220 = vpop.f32.mrb[0].mxu0
  %v221 = vpop.f32.mrb[0].mxu0
  %v222 = vadd.f32 0.0, %v221
  %v223 = vpop.f32.mrb[0].mxu0
  %224 = vmatprep.mubr.bf16.mxu0 0
  %225 = vmatmul.mubr.bf16.gmra.mrb[0].mxu0 %v121
  %v226 = vpop.f32.mrb[0].mxu0
  %v227 = vadd.f32 0.0, %v226
  %v228 = vpop.f32.mrb[0].mxu0
  %v229 = vpop.f32.mrb[0].mxu0
  %v230 = vadd.f32 0.0, %v229
  %v231 = vpop.f32.mrb[0].mxu0
  %232 = vmatprep.mubr.bf16.mxu0 0
  %233 = vmatmul.mubr.bf16.gmra.mrb[0].mxu0 %v122
  %v234 = vpop.f32.mrb[0].mxu0
  %v235 = vadd.f32 0.0, %v234
  %v236 = vpop.f32.mrb[0].mxu0
  %v237 = vpop.f32.mrb[0].mxu0
  %v238 = vadd.f32 0.0, %v237
  %v239 = vpop.f32.mrb[0].mxu0
  %240 = vmatprep.mubr.bf16.mxu0 0
  %241 = vmatmul.mubr.bf16.gmra.mrb[0].mxu0 %v123
  %v242 = vpop.f32.mrb[0].mxu0
  %v243 = vadd.f32 0.0, %v242
  %v244 = vpop.f32.mrb[0].mxu0
  %v245 = vpop.f32.mrb[0].mxu0
  %v246 = vadd.f32 0.0, %v245
  %v247 = vpop.f32.mrb[0].mxu0
  %248 = vmatprep.mubr.bf16.mxu0 0
  %249 = vmatmul.mubr.bf16.gmra.mrb[0].mxu0 %v124
  %v250 = vpop.f32.mrb[0].mxu0
  %v251 = vadd.f32 0.0, %v250
  %v252 = vpop.f32.mrb[0].mxu0
  %v253 = vpop.f32.mrb[0].mxu0
  %v254 = vadd.f32 0.0, %v253
  %v255 = vpop.f32.mrb[0].mxu0
  %256 = vmatprep.mubr.bf16.mxu0 0
  %257 = vmatmul.mubr.bf16.gmra.mrb[0].mxu0 %v125
  %v258 = vpop.f32.mrb[0].mxu0
  %v259 = vadd.f32 0.0, %v258
  %v260 = vpop.f32.mrb[0].mxu0
  %v261 = vpop.f32.mrb[0].mxu0
  %v262 = vadd.f32 0.0, %v261
  %v263 = vpop.f32.mrb[0].mxu0
  %264 = vmatprep.mubr.bf16.mxu0 0
  %265 = vmatmul.mubr.bf16.gmra.mrb[0].mxu0 %v126
  %v266 = vpop.f32.mrb[0].mxu0
  %v267 = vadd.f32 0.0, %v266
  %v268 = vpop.f32.mrb[0].mxu0
  %v269 = vpop.f32.mrb[0].mxu0
  %v270 = vadd.f32 0.0, %v269
  %v271 = vpop.f32.mrb[0].mxu0
  %272 = vmatprep.mubr.bf16.mxu0 0
  %273 = vmatmul.mubr.bf16.gmra.mrb[0].mxu0 %v127
  %v274 = vpop.f32.mrb[0].mxu0
  %v275 = vadd.f32 0.0, %v274
  %v276 = vpop.f32.mrb[0].mxu0
  %v277 = vpop.f32.mrb[0].mxu0
  %v278 = vadd.f32 0.0, %v277
  %v279 = vpop.f32.mrb[0].mxu0
  %280 = vdwg.mxu0
  %v281 = vadd.f32 %v40, %v219
  %v282 = vadd.f32 %v41, %v222
  %v283 = vadd.f32 %v42, %v227
  %v284 = vadd.f32 %v43, %v230
  %v285 = vadd.f32 %v44, %v235
  %v286 = vadd.f32 %v45, %v238
  %v287 = vadd.f32 %v46, %v243
  %v288 = vadd.f32 %v47, %v246
  %v289 = vadd.f32 %v48, %v251
  %v290 = vadd.f32 %v49, %v254
  %v291 = vadd.f32 %v50, %v259
  %v292 = vadd.f32 %v51, %v262
  %v293 = vadd.f32 %v52, %v267
  %v294 = vadd.f32 %v53, %v270
  %v295 = vadd.f32 %v54, %v275
  %v296 = vadd.f32 %v55, %v278
  %297 = vst [vmem:[#allocation2] sm:$0xff] %v281
  %298 = vst [vmem:[#allocation2 + $0x8] sm:$0xff] %v282
  %299 = vst [vmem:[#allocation2 + $0x10] sm:$0xff] %v283
  %300 = vst [vmem:[#allocation2 + $0x18] sm:$0xff] %v284
  %301 = vst [vmem:[#allocation2 + $0x20] sm:$0xff] %v285
  %302 = vst [vmem:[#allocation2 + $0x28] sm:$0xff] %v286
  %303 = vst [vmem:[#allocation2 + $0x30] sm:$0xff] %v287
  %304 = vst [vmem:[#allocation2 + $0x38] sm:$0xff] %v288
  %305 = vst [vmem:[#allocation2 + $0x40] sm:$0xff] %v289
  %306 = vst [vmem:[#allocation2 + $0x48] sm:$0xff] %v290
  %307 = vst [vmem:[#allocation2 + $0x50] sm:$0xff] %v291
  %308 = vst [vmem:[#allocation2 + $0x58] sm:$0xff] %v292
  %309 = vst [vmem:[#allocation2 + $0x60] sm:$0xff] %v293
  %310 = vst [vmem:[#allocation2 + $0x68] sm:$0xff] %v294
  %311 = vst [vmem:[#allocation2 + $0x70] sm:$0xff] %v295
  %312 = vst [vmem:[#allocation2 + $0x78] sm:$0xff] %v296
  // Predicated region
  $region22: #{_lambda_.4} parent=0 // pred_check
    %p313 = pneg %p20
  $region23: #{_lambda_.4} parent=0 // pred_check_branch
    %315 = sbr.rel (%p313) target = $region25
  $region24: #{_lambda_.4} parent=0 // pred_region
    %v316 = vld [vmem:[#allocation2] sm:$0xff]
    %v317 = vld [vmem:[#allocation2 + $0x8] sm:$0xff]
    %v318 = vld [vmem:[#allocation2 + $0x10] sm:$0xff]
    %v319 = vld [vmem:[#allocation2 + $0x18] sm:$0xff]
    %v320 = vld [vmem:[#allocation2 + $0x20] sm:$0xff]
    %v321 = vld [vmem:[#allocation2 + $0x28] sm:$0xff]
    %v322 = vld [vmem:[#allocation2 + $0x30] sm:$0xff]
    %v323 = vld [vmem:[#allocation2 + $0x38] sm:$0xff]
    %v324 = vld [vmem:[#allocation2 + $0x40] sm:$0xff]
    %v325 = vld [vmem:[#allocation2 + $0x48] sm:$0xff]
    %v326 = vld [vmem:[#allocation2 + $0x50] sm:$0xff]
    %v327 = vld [vmem:[#allocation2 + $0x58] sm:$0xff]
    %v328 = vld [vmem:[#allocation2 + $0x60] sm:$0xff]
    %v329 = vld [vmem:[#allocation2 + $0x68] sm:$0xff]
    %v330 = vld [vmem:[#allocation2 + $0x70] sm:$0xff]
    %v331 = vld [vmem:[#allocation2 + $0x78] sm:$0xff]
    %v332 = vmax.f32 %v316, 0.0
    %v333 = vmax.f32 %v317, 0.0
    %v334 = vmax.f32 %v318, 0.0
    %v335 = vmax.f32 %v319, 0.0
    %v336 = vmax.f32 %v320, 0.0
    %v337 = vmax.f32 %v321, 0.0
    %v338 = vmax.f32 %v322, 0.0
    %v339 = vmax.f32 %v323, 0.0
    %v340 = vmax.f32 %v324, 0.0
    %v341 = vmax.f32 %v325, 0.0
    %v342 = vmax.f32 %v326, 0.0
    %v343 = vmax.f32 %v327, 0.0
    %v344 = vmax.f32 %v328, 0.0
    %v345 = vmax.f32 %v329, 0.0
    %v346 = vmax.f32 %v330, 0.0
    %v347 = vmax.f32 %v331, 0.0
    %v348 = vpack.c.bf16 %v333, %v332
    %v349 = vpack.c.bf16 %v335, %v334
    %v350 = vpack.c.bf16 %v337, %v336
    %v351 = vpack.c.bf16 %v339, %v338
    %v352 = vpack.c.bf16 %v341, %v340
    %v353 = vpack.c.bf16 %v343, %v342
    %v354 = vpack.c.bf16 %v345, %v344
    %v355 = vpack.c.bf16 %v347, %v346
    %v356 = vld [vmem:[%s2] sm:$0xf]
    %v357 = vld [vmem:[%s2 + $0x4] sm:$0xf]
    %v358 = vld [vmem:[%s2 + $0x8] sm:$0xf]
    %v359 = vld [vmem:[%s2 + $0xc] sm:$0xf]
    %v360 = vld [vmem:[%s2 + $0x10] sm:$0xf]
    %v361 = vld [vmem:[%s2 + $0x14] sm:$0xf]
    %v362 = vld [vmem:[%s2 + $0x18] sm:$0xf]
    %v363 = vld [vmem:[%s2 + $0x1c] sm:$0xf]
    %v364 = vld [vmem:[%s2 + $0x20] sm:$0xf]
    %v365 = vld [vmem:[%s2 + $0x24] sm:$0xf]
    %v366 = vld [vmem:[%s2 + $0x28] sm:$0xf]
    %v367 = vld [vmem:[%s2 + $0x2c] sm:$0xf]
    %v368 = vld [vmem:[%s2 + $0x30] sm:$0xf]
    %v369 = vld [vmem:[%s2 + $0x34] sm:$0xf]
    %v370 = vld [vmem:[%s2 + $0x38] sm:$0xf]
    %v371 = vld [vmem:[%s2 + $0x3c] sm:$0xf]
    %v372 = vld [vmem:[%s3] sm:$0x1]
    %v374 = vlaneseq
    %v375 = vshrl.u32 %v374, 7
    %v376 = vsub.s32 0, %v375
    %v377 = vrot.slane %v372, %v376
    %v395 = vunpack.c.l.b16 %v356
    %v396 = vunpack.c.l.b16 %v357
    %v397 = vunpack.c.l.b16 %v358
    %v398 = vunpack.c.l.b16 %v359
    %v399 = vunpack.c.l.b16 %v360
    %v400 = vunpack.c.l.b16 %v361
    %v401 = vunpack.c.l.b16 %v362
    %v402 = vunpack.c.l.b16 %v363
    %v403 = vunpack.c.l.b16 %v364
    %v404 = vunpack.c.l.b16 %v365
    %v405 = vunpack.c.l.b16 %v366
    %v406 = vunpack.c.l.b16 %v367
    %v407 = vunpack.c.l.b16 %v368
    %v408 = vunpack.c.l.b16 %v369
    %v409 = vunpack.c.l.b16 %v370
    %v410 = vunpack.c.l.b16 %v371
    %v411 = vpack.c.b16 %v396, %v395
    %v412 = vpack.c.b16 %v398, %v397
    %v413 = vpack.c.b16 %v400, %v399
    %v414 = vpack.c.b16 %v402, %v401
    %v415 = vpack.c.b16 %v404, %v403
    %v416 = vpack.c.b16 %v406, %v405
    %v417 = vpack.c.b16 %v408, %v407
    %v418 = vpack.c.b16 %v410, %v409
    %427 = vmatprep.subr.bf16.mxu0 0
    %428 = vmatpush1.bf16.msra.mxu0 %v411
    %429 = vmatprep.subr.bf16.mxu0 0
    %430 = vmatpush1.bf16.msra.mxu0 %v412
    %431 = vmatprep.subr.bf16.mxu0 0
    %432 = vmatpush1.bf16.msra.mxu0 %v413
    %433 = vmatprep.subr.bf16.mxu0 0
    %434 = vmatpush1.bf16.msra.mxu0 %v414
    %435 = vmatprep.subr.bf16.mxu0 0
    %436 = vmatpush1.bf16.msra.mxu0 %v415
    %437 = vmatprep.subr.bf16.mxu0 0
    %438 = vmatpush1.bf16.msra.mxu0 %v416
    %439 = vmatprep.subr.bf16.mxu0 0
    %440 = vmatpush1.bf16.msra.mxu0 %v417
    %441 = vmatprep.subr.bf16.mxu0 0
    %442 = vmatpush1.bf16.msra.mxu0 %v418
    %443 = vmatprep.subr.bf16.mxu0 0
    %444 = vmatpush1.bf16.msra.mxu0 0
    %445 = vmatprep.subr.bf16.mxu0 0
    %446 = vmatpush1.bf16.msra.mxu0 0
    %447 = vmatprep.subr.bf16.mxu0 0
    %448 = vmatpush1.bf16.msra.mxu0 0
    %449 = vmatprep.subr.bf16.mxu0 0
    %450 = vmatpush1.bf16.msra.mxu0 0
    %451 = vmatprep.subr.bf16.mxu0 0
    %452 = vmatpush1.bf16.msra.mxu0 0
    %453 = vmatprep.subr.bf16.mxu0 0
    %454 = vmatpush1.bf16.msra.mxu0 0
    %455 = vmatprep.subr.bf16.mxu0 0
    %456 = vmatpush1.bf16.msra.mxu0 0
    %457 = vmatprep.subr.bf16.mxu0 0
    %458 = vmatpush1.bf16.msra.mxu0 0
    %459 = vmatprep.mubr.bf16.mxu0 0
    %460 = vmatmul.mubr.bf16.gmra.mrb[0].mxu0 %v348
    %v461 = vpop.f32.mrb[0].mxu0
    %v462 = vadd.f32 %v377, %v461
    %v463 = vpop.f32.mrb[0].mxu0
    %v464 = vpop.f32.mrb[0].mxu0
    %v465 = vadd.f32 %v377, %v464
    %v466 = vpop.f32.mrb[0].mxu0
    %467 = vmatprep.mubr.bf16.mxu0 0
    %468 = vmatmul.mubr.bf16.gmra.mrb[0].mxu0 %v349
    %v469 = vpop.f32.mrb[0].mxu0
    %v470 = vadd.f32 %v377, %v469
    %v471 = vpop.f32.mrb[0].mxu0
    %v472 = vpop.f32.mrb[0].mxu0
    %v473 = vadd.f32 %v377, %v472
    %v474 = vpop.f32.mrb[0].mxu0
    %475 = vmatprep.mubr.bf16.mxu0 0
    %476 = vmatmul.mubr.bf16.gmra.mrb[0].mxu0 %v350
    %v477 = vpop.f32.mrb[0].mxu0
    %v478 = vadd.f32 %v377, %v477
    %v479 = vpop.f32.mrb[0].mxu0
    %v480 = vpop.f32.mrb[0].mxu0
    %v481 = vadd.f32 %v377, %v480
    %v482 = vpop.f32.mrb[0].mxu0
    %483 = vmatprep.mubr.bf16.mxu0 0
    %484 = vmatmul.mubr.bf16.gmra.mrb[0].mxu0 %v351
    %v485 = vpop.f32.mrb[0].mxu0
    %v486 = vadd.f32 %v377, %v485
    %v487 = vpop.f32.mrb[0].mxu0
    %v488 = vpop.f32.mrb[0].mxu0
    %v489 = vadd.f32 %v377, %v488
    %v490 = vpop.f32.mrb[0].mxu0
    %491 = vmatprep.mubr.bf16.mxu0 0
    %492 = vmatmul.mubr.bf16.gmra.mrb[0].mxu0 %v352
    %v493 = vpop.f32.mrb[0].mxu0
    %v494 = vadd.f32 %v377, %v493
    %v495 = vpop.f32.mrb[0].mxu0
    %v496 = vpop.f32.mrb[0].mxu0
    %v497 = vadd.f32 %v377, %v496
    %v498 = vpop.f32.mrb[0].mxu0
    %499 = vmatprep.mubr.bf16.mxu0 0
    %500 = vmatmul.mubr.bf16.gmra.mrb[0].mxu0 %v353
    %v501 = vpop.f32.mrb[0].mxu0
    %v502 = vadd.f32 %v377, %v501
    %v503 = vpop.f32.mrb[0].mxu0
    %v504 = vpop.f32.mrb[0].mxu0
    %v505 = vadd.f32 %v377, %v504
    %v506 = vpop.f32.mrb[0].mxu0
    %507 = vmatprep.mubr.bf16.mxu0 0
    %508 = vmatmul.mubr.bf16.gmra.mrb[0].mxu0 %v354
    %v509 = vpop.f32.mrb[0].mxu0
    %v510 = vadd.f32 %v377, %v509
    %v511 = vpop.f32.mrb[0].mxu0
    %v512 = vpop.f32.mrb[0].mxu0
    %v513 = vadd.f32 %v377, %v512
    %v514 = vpop.f32.mrb[0].mxu0
    %515 = vmatprep.mubr.bf16.mxu0 0
    %516 = vmatmul.mubr.bf16.gmra.mrb[0].mxu0 %v355
    %v517 = vpop.f32.mrb[0].mxu0
    %v518 = vadd.f32 %v377, %v517
    %v519 = vpop.f32.mrb[0].mxu0
    %v520 = vpop.f32.mrb[0].mxu0
    %v521 = vadd.f32 %v377, %v520
    %v522 = vpop.f32.mrb[0].mxu0
    %523 = vdwg.mxu0
    %524 = vst [vmem:[%s4] sm:$0xff] %v462
    %525 = vst [vmem:[%s4 + $0x8] sm:$0xff] %v465
    %526 = vst [vmem:[%s4 + $0x10] sm:$0xff] %v470
    %527 = vst [vmem:[%s4 + $0x18] sm:$0xff] %v473
    %528 = vst [vmem:[%s4 + $0x20] sm:$0xff] %v478
    %529 = vst [vmem:[%s4 + $0x28] sm:$0xff] %v481
    %530 = vst [vmem:[%s4 + $0x30] sm:$0xff] %v486
    %531 = vst [vmem:[%s4 + $0x38] sm:$0xff] %v489
    %532 = vst [vmem:[%s4 + $0x40] sm:$0xff] %v494
    %533 = vst [vmem:[%s4 + $0x48] sm:$0xff] %v497
    %534 = vst [vmem:[%s4 + $0x50] sm:$0xff] %v502
    %535 = vst [vmem:[%s4 + $0x58] sm:$0xff] %v505
    %536 = vst [vmem:[%s4 + $0x60] sm:$0xff] %v510
    %537 = vst [vmem:[%s4 + $0x68] sm:$0xff] %v513
    %538 = vst [vmem:[%s4 + $0x70] sm:$0xff] %v518
    %539 = vst [vmem:[%s4 + $0x78] sm:$0xff] %v521
    %v540 = vpack.c.bf16 %v465, %v462
    %v541 = vpack.c.bf16 %v473, %v470
    %v542 = vpack.c.bf16 %v481, %v478
    %v543 = vpack.c.bf16 %v489, %v486
    %v544 = vpack.c.bf16 %v497, %v494
    %v545 = vpack.c.bf16 %v505, %v502
    %v546 = vpack.c.bf16 %v513, %v510
    %v547 = vpack.c.bf16 %v521, %v518
    %v556 = vunpack.c.l.b16 %v540
    %v557 = vunpack.c.h.b16 %v540
    %v558 = vunpack.c.l.b16 %v541
    %v559 = vunpack.c.h.b16 %v541
    %v560 = vunpack.c.l.b16 %v542
    %v561 = vunpack.c.h.b16 %v542
    %v562 = vunpack.c.l.b16 %v543
    %v563 = vunpack.c.h.b16 %v543
    %v564 = vunpack.c.l.b16 %v544
    %v565 = vunpack.c.h.b16 %v544
    %v566 = vunpack.c.l.b16 %v545
    %v567 = vunpack.c.h.b16 %v545
    %v568 = vunpack.c.l.b16 %v546
    %v569 = vunpack.c.h.b16 %v546
    %v570 = vunpack.c.l.b16 %v547
    %v571 = vunpack.c.h.b16 %v547
    %v572 = vpack.c.b16 %v556, %v556
    %v573 = vpack.c.b16 %v557, %v557
    %v574 = vpack.c.b16 %v558, %v558
    %v575 = vpack.c.b16 %v559, %v559
    %v576 = vpack.c.b16 %v560, %v560
    %v577 = vpack.c.b16 %v561, %v561
    %v578 = vpack.c.b16 %v562, %v562
    %v579 = vpack.c.b16 %v563, %v563
    %v580 = vpack.c.b16 %v564, %v564
    %v581 = vpack.c.b16 %v565, %v565
    %v582 = vpack.c.b16 %v566, %v566
    %v583 = vpack.c.b16 %v567, %v567
    %v584 = vpack.c.b16 %v568, %v568
    %v585 = vpack.c.b16 %v569, %v569
    %v586 = vpack.c.b16 %v570, %v570
    %v587 = vpack.c.b16 %v571, %v571
    %604 = vst [vmem:[%s5] sm:$0xf] %v572
    %605 = vst [vmem:[%s5 + $0x4] sm:$0xf] %v573
    %606 = vst [vmem:[%s5 + $0x8] sm:$0xf] %v574
    %607 = vst [vmem:[%s5 + $0xc] sm:$0xf] %v575
    %608 = vst [vmem:[%s5 + $0x10] sm:$0xf] %v576
    %609 = vst [vmem:[%s5 + $0x14] sm:$0xf] %v577
    %610 = vst [vmem:[%s5 + $0x18] sm:$0xf] %v578
    %611 = vst [vmem:[%s5 + $0x1c] sm:$0xf] %v579
    %612 = vst [vmem:[%s5 + $0x20] sm:$0xf] %v580
    %613 = vst [vmem:[%s5 + $0x24] sm:$0xf] %v581
    %614 = vst [vmem:[%s5 + $0x28] sm:$0xf] %v582
    %615 = vst [vmem:[%s5 + $0x2c] sm:$0xf] %v583
    %616 = vst [vmem:[%s5 + $0x30] sm:$0xf] %v584
    %617 = vst [vmem:[%s5 + $0x34] sm:$0xf] %v585
    %618 = vst [vmem:[%s5 + $0x38] sm:$0xf] %v586
    %619 = vst [vmem:[%s5 + $0x3c] sm:$0xf] %v587
  $region25: #{_lambda_.4} parent=0 // pred_fallthru
    _
  // Predicated region
  $region26: #{_lambda_.4} parent=0 // pred_check
    _
  $region27: #{_lambda_.4} parent=0 // pred_check_branch
    %621 = sbr.rel (0) target = $region29
  $region28: #{_lambda_.4} parent=0 // pred_region
    _
  $region29: #{_lambda_.4} parent=0 // pred_fallthru
    _
  // Predicated region
  $region30: #{_lambda_.4} parent=0 // pred_check
    _
  $region31: #{_lambda_.4} parent=0 // pred_check_branch
    %623 = sbr.rel (0) target = $region33
  $region32: #{_lambda_.4} parent=0 // pred_region
    _
  $region33: #{_lambda_.4} parent=0 // pred_fallthru
    _
  // Predicated region
  $region34: #{_lambda_.4} parent=0 // pred_check
    _
  $region35: #{_lambda_.4} parent=0 // pred_check_branch
    %625 = sbr.rel (0) target = $region37
  $region36: #{_lambda_.4} parent=0 // pred_region
    _
  $region37: #{_lambda_.4} parent=0 // pred_fallthru
    _
  // Predicated region
  $region38: #{_lambda_.4} parent=0 // pred_check
    _
  $region39: #{_lambda_.4} parent=0 // pred_check_branch
    %627 = sbr.rel (0) target = $region41
  $region40: #{_lambda_.4} parent=0 // pred_region
    _
  $region41: #{_lambda_.4} parent=0 // pred_fallthru
    _

// kernel: _lambda_.5
$region0: #{_lambda_.5}
  #allocation0 [shape = 'u32[]', space=smem, size = 0x4, offset = 0x4, fixed_abs, tag = 'smem constant byte address 0x4 - core index']
  #allocation1 [shape = 'u32[144,128]{1,0:T(1,128)}', space=vmem, size = 0x12000, scoped, tag = 'internal scratch']
  #allocation2 [shape = 'f32[128,128]{1,0:T(8,128)}', space=vmem, size = 0x10000, scoped, tag = 'scratch operand']
  %s0 = inlined_call_operand.vmem [shape: bf16[128,128], index: 0, kind: input, shape index: {}]
  %s1 = inlined_call_operand.vmem [shape: bf16[128,128], index: 1, kind: input, shape index: {}]
  %s2 = inlined_call_operand.vmem [shape: bf16[128,128], index: 2, kind: input, shape index: {}]
  %s3 = inlined_call_operand.vmem [shape: f32[1,128], index: 3, kind: input, shape index: {}]
  %s4 = inlined_call_operand.vmem [shape: f32[128,128], index: 4, kind: output, shape index: {}]
  %s5 = sld [smem:[#allocation0]]
  $region34: #{_lambda_.5} parent=0
    _
  %s7 = ssub.s32 1, %s5
  %s8 = scalar_select 0, %s7, %s5
  // Predicated region
  $region2: #{_lambda_.5} parent=0 // pred_check
    _
  $region3: #{_lambda_.5} parent=0 // pred_check_branch
    %10 = sbr.rel (0) target = $region5
  $region4: #{_lambda_.5} parent=0 // pred_region
    _
  $region5: #{_lambda_.5} parent=0 // pred_fallthru
    _
  // Predicated region
  $region6: #{_lambda_.5} parent=0 // pred_check
    _
  $region7: #{_lambda_.5} parent=0 // pred_check_branch
    %12 = sbr.rel (0) target = $region9
  $region8: #{_lambda_.5} parent=0 // pred_region
    _
  $region9: #{_lambda_.5} parent=0 // pred_fallthru
    _
  // Predicated region
  $region10: #{_lambda_.5} parent=0 // pred_check
    _
  $region11: #{_lambda_.5} parent=0 // pred_check_branch
    %14 = sbr.rel (0) target = $region13
  $region12: #{_lambda_.5} parent=0 // pred_region
    _
  $region13: #{_lambda_.5} parent=0 // pred_fallthru
    _
  // Predicated region
  $region14: #{_lambda_.5} parent=0 // pred_check
    _
  $region15: #{_lambda_.5} parent=0 // pred_check_branch
    %16 = sbr.rel (0) target = $region17
  $region16: #{_lambda_.5} parent=0 // pred_region
    _
  $region17: #{_lambda_.5} parent=0 // pred_fallthru
    _
  %p18 = scmp.eq.s32.totalorder 0, 0
  // Predicated region
  $region18: #{_lambda_.5} parent=0 // pred_check
    %p19 = pneg %p18
  $region19: #{_lambda_.5} parent=0 // pred_check_branch
    %21 = sbr.rel (%p19) target = $region21
  $region20: #{_lambda_.5} parent=0 // pred_region
    %22 = vst [vmem:[#allocation2] sm:$0xff] 0.0
    %23 = vst [vmem:[#allocation2 + $0x8] sm:$0xff] 0.0
    %24 = vst [vmem:[#allocation2 + $0x10] sm:$0xff] 0.0
    %25 = vst [vmem:[#allocation2 + $0x18] sm:$0xff] 0.0
    %26 = vst [vmem:[#allocation2 + $0x20] sm:$0xff] 0.0
    %27 = vst [vmem:[#allocation2 + $0x28] sm:$0xff] 0.0
    %28 = vst [vmem:[#allocation2 + $0x30] sm:$0xff] 0.0
    %29 = vst [vmem:[#allocation2 + $0x38] sm:$0xff] 0.0
    %30 = vst [vmem:[#allocation2 + $0x40] sm:$0xff] 0.0
    %31 = vst [vmem:[#allocation2 + $0x48] sm:$0xff] 0.0
    %32 = vst [vmem:[#allocation2 + $0x50] sm:$0xff] 0.0
    %33 = vst [vmem:[#allocation2 + $0x58] sm:$0xff] 0.0
    %34 = vst [vmem:[#allocation2 + $0x60] sm:$0xff] 0.0
    %35 = vst [vmem:[#allocation2 + $0x68] sm:$0xff] 0.0
    %36 = vst [vmem:[#allocation2 + $0x70] sm:$0xff] 0.0
    %37 = vst [vmem:[#allocation2 + $0x78] sm:$0xff] 0.0
  $region21: #{_lambda_.5} parent=0 // pred_fallthru
    _
  %v38 = vld [vmem:[#allocation2] sm:$0xff]
  %v39 = vld [vmem:[#allocation2 + $0x8] sm:$0xff]
  %v40 = vld [vmem:[#allocation2 + $0x10] sm:$0xff]
  %v41 = vld [vmem:[#allocation2 + $0x18] sm:$0xff]
  %v42 = vld [vmem:[#allocation2 + $0x20] sm:$0xff]
  %v43 = vld [vmem:[#allocation2 + $0x28] sm:$0xff]
  %v44 = vld [vmem:[#allocation2 + $0x30] sm:$0xff]
  %v45 = vld [vmem:[#allocation2 + $0x38] sm:$0xff]
  %v46 = vld [vmem:[#allocation2 + $0x40] sm:$0xff]
  %v47 = vld [vmem:[#allocation2 + $0x48] sm:$0xff]
  %v48 = vld [vmem:[#allocation2 + $0x50] sm:$0xff]
  %v49 = vld [vmem:[#allocation2 + $0x58] sm:$0xff]
  %v50 = vld [vmem:[#allocation2 + $0x60] sm:$0xff]
  %v51 = vld [vmem:[#allocation2 + $0x68] sm:$0xff]
  %v52 = vld [vmem:[#allocation2 + $0x70] sm:$0xff]
  %v53 = vld [vmem:[#allocation2 + $0x78] sm:$0xff]
  %v54 = vld [vmem:[%s0] sm:$0xf]
  %v55 = vld [vmem:[%s0 + $0x4] sm:$0xf]
  %v56 = vld [vmem:[%s0 + $0x8] sm:$0xf]
  %v57 = vld [vmem:[%s0 + $0xc] sm:$0xf]
  %v58 = vld [vmem:[%s0 + $0x10] sm:$0xf]
  %v59 = vld [vmem:[%s0 + $0x14] sm:$0xf]
  %v60 = vld [vmem:[%s0 + $0x18] sm:$0xf]
  %v61 = vld [vmem:[%s0 + $0x1c] sm:$0xf]
  %v62 = vld [vmem:[%s0 + $0x20] sm:$0xf]
  %v63 = vld [vmem:[%s0 + $0x24] sm:$0xf]
  %v64 = vld [vmem:[%s0 + $0x28] sm:$0xf]
  %v65 = vld [vmem:[%s0 + $0x2c] sm:$0xf]
  %v66 = vld [vmem:[%s0 + $0x30] sm:$0xf]
  %v67 = vld [vmem:[%s0 + $0x34] sm:$0xf]
  %v68 = vld [vmem:[%s0 + $0x38] sm:$0xf]
  %v69 = vld [vmem:[%s0 + $0x3c] sm:$0xf]
  %v70 = vld [vmem:[%s1] sm:$0xf]
  %v71 = vld [vmem:[%s1 + $0x4] sm:$0xf]
  %v72 = vld [vmem:[%s1 + $0x8] sm:$0xf]
  %v73 = vld [vmem:[%s1 + $0xc] sm:$0xf]
  %v74 = vld [vmem:[%s1 + $0x10] sm:$0xf]
  %v75 = vld [vmem:[%s1 + $0x14] sm:$0xf]
  %v76 = vld [vmem:[%s1 + $0x18] sm:$0xf]
  %v77 = vld [vmem:[%s1 + $0x1c] sm:$0xf]
  %v78 = vld [vmem:[%s1 + $0x20] sm:$0xf]
  %v79 = vld [vmem:[%s1 + $0x24] sm:$0xf]
  %v80 = vld [vmem:[%s1 + $0x28] sm:$0xf]
  %v81 = vld [vmem:[%s1 + $0x2c] sm:$0xf]
  %v82 = vld [vmem:[%s1 + $0x30] sm:$0xf]
  %v83 = vld [vmem:[%s1 + $0x34] sm:$0xf]
  %v84 = vld [vmem:[%s1 + $0x38] sm:$0xf]
  %v85 = vld [vmem:[%s1 + $0x3c] sm:$0xf]
  %v102 = vunpack.c.l.b16 %v54
  %v103 = vunpack.c.l.b16 %v55
  %v104 = vunpack.c.l.b16 %v56
  %v105 = vunpack.c.l.b16 %v57
  %v106 = vunpack.c.l.b16 %v58
  %v107 = vunpack.c.l.b16 %v59
  %v108 = vunpack.c.l.b16 %v60
  %v109 = vunpack.c.l.b16 %v61
  %v110 = vunpack.c.l.b16 %v62
  %v111 = vunpack.c.l.b16 %v63
  %v112 = vunpack.c.l.b16 %v64
  %v113 = vunpack.c.l.b16 %v65
  %v114 = vunpack.c.l.b16 %v66
  %v115 = vunpack.c.l.b16 %v67
  %v116 = vunpack.c.l.b16 %v68
  %v117 = vunpack.c.l.b16 %v69
  %v118 = vpack.c.b16 %v103, %v102
  %v119 = vpack.c.b16 %v105, %v104
  %v120 = vpack.c.b16 %v107, %v106
  %v121 = vpack.c.b16 %v109, %v108
  %v122 = vpack.c.b16 %v111, %v110
  %v123 = vpack.c.b16 %v113, %v112
  %v124 = vpack.c.b16 %v115, %v114
  %v125 = vpack.c.b16 %v117, %v116
  %v150 = vunpack.c.l.b16 %v70
  %v151 = vunpack.c.l.b16 %v71
  %v152 = vunpack.c.l.b16 %v72
  %v153 = vunpack.c.l.b16 %v73
  %v154 = vunpack.c.l.b16 %v74
  %v155 = vunpack.c.l.b16 %v75
  %v156 = vunpack.c.l.b16 %v76
  %v157 = vunpack.c.l.b16 %v77
  %v158 = vunpack.c.l.b16 %v78
  %v159 = vunpack.c.l.b16 %v79
  %v160 = vunpack.c.l.b16 %v80
  %v161 = vunpack.c.l.b16 %v81
  %v162 = vunpack.c.l.b16 %v82
  %v163 = vunpack.c.l.b16 %v83
  %v164 = vunpack.c.l.b16 %v84
  %v165 = vunpack.c.l.b16 %v85
  %v166 = vpack.c.b16 %v151, %v150
  %v167 = vpack.c.b16 %v153, %v152
  %v168 = vpack.c.b16 %v155, %v154
  %v169 = vpack.c.b16 %v157, %v156
  %v170 = vpack.c.b16 %v159, %v158
  %v171 = vpack.c.b16 %v161, %v160
  %v172 = vpack.c.b16 %v163, %v162
  %v173 = vpack.c.b16 %v165, %v164
  %182 = vmatprep.subr.bf16.mxu0 0
  %183 = vmatpush1.bf16.msra.mxu0 %v166
  %184 = vmatprep.subr.bf16.mxu0 0
  %185 = vmatpush1.bf16.msra.mxu0 %v167
  %186 = vmatprep.subr.bf16.mxu0 0
  %187 = vmatpush1.bf16.msra.mxu0 %v168
  %188 = vmatprep.subr.bf16.mxu0 0
  %189 = vmatpush1.bf16.msra.mxu0 %v169
  %190 = vmatprep.subr.bf16.mxu0 0
  %191 = vmatpush1.bf16.msra.mxu0 %v170
  %192 = vmatprep.subr.bf16.mxu0 0
  %193 = vmatpush1.bf16.msra.mxu0 %v171
  %194 = vmatprep.subr.bf16.mxu0 0
  %195 = vmatpush1.bf16.msra.mxu0 %v172
  %196 = vmatprep.subr.bf16.mxu0 0
  %197 = vmatpush1.bf16.msra.mxu0 %v173
  %198 = vmatprep.subr.bf16.mxu0 0
  %199 = vmatpush1.bf16.msra.mxu0 0
  %200 = vmatprep.subr.bf16.mxu0 0
  %201 = vmatpush1.bf16.msra.mxu0 0
  %202 = vmatprep.subr.bf16.mxu0 0
  %203 = vmatpush1.bf16.msra.mxu0 0
  %204 = vmatprep.subr.bf16.mxu0 0
  %205 = vmatpush1.bf16.msra.mxu0 0
  %206 = vmatprep.subr.bf16.mxu0 0
  %207 = vmatpush1.bf16.msra.mxu0 0
  %208 = vmatprep.subr.bf16.mxu0 0
  %209 = vmatpush1.bf16.msra.mxu0 0
  %210 = vmatprep.subr.bf16.mxu0 0
  %211 = vmatpush1.bf16.msra.mxu0 0
  %212 = vmatprep.subr.bf16.mxu0 0
  %213 = vmatpush1.bf16.msra.mxu0 0
  %214 = vmatprep.mubr.bf16.mxu0 0
  %215 = vmatmul.mubr.bf16.gmra.mrb[0].mxu0 %v118
  %v216 = vpop.f32.mrb[0].mxu0
  %v217 = vadd.f32 0.0, %v216
  %v218 = vpop.f32.mrb[0].mxu0
  %v219 = vpop.f32.mrb[0].mxu0
  %v220 = vadd.f32 0.0, %v219
  %v221 = vpop.f32.mrb[0].mxu0
  %222 = vmatprep.mubr.bf16.mxu0 0
  %223 = vmatmul.mubr.bf16.gmra.mrb[0].mxu0 %v119
  %v224 = vpop.f32.mrb[0].mxu0
  %v225 = vadd.f32 0.0, %v224
  %v226 = vpop.f32.mrb[0].mxu0
  %v227 = vpop.f32.mrb[0].mxu0
  %v228 = vadd.f32 0.0, %v227
  %v229 = vpop.f32.mrb[0].mxu0
  %230 = vmatprep.mubr.bf16.mxu0 0
  %231 = vmatmul.mubr.bf16.gmra.mrb[0].mxu0 %v120
  %v232 = vpop.f32.mrb[0].mxu0
  %v233 = vadd.f32 0.0, %v232
  %v234 = vpop.f32.mrb[0].mxu0
  %v235 = vpop.f32.mrb[0].mxu0
  %v236 = vadd.f32 0.0, %v235
  %v237 = vpop.f32.mrb[0].mxu0
  %238 = vmatprep.mubr.bf16.mxu0 0
  %239 = vmatmul.mubr.bf16.gmra.mrb[0].mxu0 %v121
  %v240 = vpop.f32.mrb[0].mxu0
  %v241 = vadd.f32 0.0, %v240
  %v242 = vpop.f32.mrb[0].mxu0
  %v243 = vpop.f32.mrb[0].mxu0
  %v244 = vadd.f32 0.0, %v243
  %v245 = vpop.f32.mrb[0].mxu0
  %246 = vmatprep.mubr.bf16.mxu0 0
  %247 = vmatmul.mubr.bf16.gmra.mrb[0].mxu0 %v122
  %v248 = vpop.f32.mrb[0].mxu0
  %v249 = vadd.f32 0.0, %v248
  %v250 = vpop.f32.mrb[0].mxu0
  %v251 = vpop.f32.mrb[0].mxu0
  %v252 = vadd.f32 0.0, %v251
  %v253 = vpop.f32.mrb[0].mxu0
  %254 = vmatprep.mubr.bf16.mxu0 0
  %255 = vmatmul.mubr.bf16.gmra.mrb[0].mxu0 %v123
  %v256 = vpop.f32.mrb[0].mxu0
  %v257 = vadd.f32 0.0, %v256
  %v258 = vpop.f32.mrb[0].mxu0
  %v259 = vpop.f32.mrb[0].mxu0
  %v260 = vadd.f32 0.0, %v259
  %v261 = vpop.f32.mrb[0].mxu0
  %262 = vmatprep.mubr.bf16.mxu0 0
  %263 = vmatmul.mubr.bf16.gmra.mrb[0].mxu0 %v124
  %v264 = vpop.f32.mrb[0].mxu0
  %v265 = vadd.f32 0.0, %v264
  %v266 = vpop.f32.mrb[0].mxu0
  %v267 = vpop.f32.mrb[0].mxu0
  %v268 = vadd.f32 0.0, %v267
  %v269 = vpop.f32.mrb[0].mxu0
  %270 = vmatprep.mubr.bf16.mxu0 0
  %271 = vmatmul.mubr.bf16.gmra.mrb[0].mxu0 %v125
  %v272 = vpop.f32.mrb[0].mxu0
  %v273 = vadd.f32 0.0, %v272
  %v274 = vpop.f32.mrb[0].mxu0
  %v275 = vpop.f32.mrb[0].mxu0
  %v276 = vadd.f32 0.0, %v275
  %v277 = vpop.f32.mrb[0].mxu0
  %278 = vdwg.mxu0
  %v279 = vadd.f32 %v38, %v217
  %v280 = vadd.f32 %v39, %v220
  %v281 = vadd.f32 %v40, %v225
  %v282 = vadd.f32 %v41, %v228
  %v283 = vadd.f32 %v42, %v233
  %v284 = vadd.f32 %v43, %v236
  %v285 = vadd.f32 %v44, %v241
  %v286 = vadd.f32 %v45, %v244
  %v287 = vadd.f32 %v46, %v249
  %v288 = vadd.f32 %v47, %v252
  %v289 = vadd.f32 %v48, %v257
  %v290 = vadd.f32 %v49, %v260
  %v291 = vadd.f32 %v50, %v265
  %v292 = vadd.f32 %v51, %v268
  %v293 = vadd.f32 %v52, %v273
  %v294 = vadd.f32 %v53, %v276
  %295 = vst [vmem:[#allocation2] sm:$0xff] %v279
  %296 = vst [vmem:[#allocation2 + $0x8] sm:$0xff] %v280
  %297 = vst [vmem:[#allocation2 + $0x10] sm:$0xff] %v281
  %298 = vst [vmem:[#allocation2 + $0x18] sm:$0xff] %v282
  %299 = vst [vmem:[#allocation2 + $0x20] sm:$0xff] %v283
  %300 = vst [vmem:[#allocation2 + $0x28] sm:$0xff] %v284
  %301 = vst [vmem:[#allocation2 + $0x30] sm:$0xff] %v285
  %302 = vst [vmem:[#allocation2 + $0x38] sm:$0xff] %v286
  %303 = vst [vmem:[#allocation2 + $0x40] sm:$0xff] %v287
  %304 = vst [vmem:[#allocation2 + $0x48] sm:$0xff] %v288
  %305 = vst [vmem:[#allocation2 + $0x50] sm:$0xff] %v289
  %306 = vst [vmem:[#allocation2 + $0x58] sm:$0xff] %v290
  %307 = vst [vmem:[#allocation2 + $0x60] sm:$0xff] %v291
  %308 = vst [vmem:[#allocation2 + $0x68] sm:$0xff] %v292
  %309 = vst [vmem:[#allocation2 + $0x70] sm:$0xff] %v293
  %310 = vst [vmem:[#allocation2 + $0x78] sm:$0xff] %v294
  // Predicated region
  $region22: #{_lambda_.5} parent=0 // pred_check
    %p311 = pneg %p18
  $region23: #{_lambda_.5} parent=0 // pred_check_branch
    %313 = sbr.rel (%p311) target = $region25
  $region24: #{_lambda_.5} parent=0 // pred_region
    %v314 = vld [vmem:[#allocation2] sm:$0xff]
    %v315 = vld [vmem:[#allocation2 + $0x8] sm:$0xff]
    %v316 = vld [vmem:[#allocation2 + $0x10] sm:$0xff]
    %v317 = vld [vmem:[#allocation2 + $0x18] sm:$0xff]
    %v318 = vld [vmem:[#allocation2 + $0x20] sm:$0xff]
    %v319 = vld [vmem:[#allocation2 + $0x28] sm:$0xff]
    %v320 = vld [vmem:[#allocation2 + $0x30] sm:$0xff]
    %v321 = vld [vmem:[#allocation2 + $0x38] sm:$0xff]
    %v322 = vld [vmem:[#allocation2 + $0x40] sm:$0xff]
    %v323 = vld [vmem:[#allocation2 + $0x48] sm:$0xff]
    %v324 = vld [vmem:[#allocation2 + $0x50] sm:$0xff]
    %v325 = vld [vmem:[#allocation2 + $0x58] sm:$0xff]
    %v326 = vld [vmem:[#allocation2 + $0x60] sm:$0xff]
    %v327 = vld [vmem:[#allocation2 + $0x68] sm:$0xff]
    %v328 = vld [vmem:[#allocation2 + $0x70] sm:$0xff]
    %v329 = vld [vmem:[#allocation2 + $0x78] sm:$0xff]
    %v330 = vmax.f32 %v314, 0.0
    %v331 = vmax.f32 %v315, 0.0
    %v332 = vmax.f32 %v316, 0.0
    %v333 = vmax.f32 %v317, 0.0
    %v334 = vmax.f32 %v318, 0.0
    %v335 = vmax.f32 %v319, 0.0
    %v336 = vmax.f32 %v320, 0.0
    %v337 = vmax.f32 %v321, 0.0
    %v338 = vmax.f32 %v322, 0.0
    %v339 = vmax.f32 %v323, 0.0
    %v340 = vmax.f32 %v324, 0.0
    %v341 = vmax.f32 %v325, 0.0
    %v342 = vmax.f32 %v326, 0.0
    %v343 = vmax.f32 %v327, 0.0
    %v344 = vmax.f32 %v328, 0.0
    %v345 = vmax.f32 %v329, 0.0
    %v346 = vpack.c.bf16 %v331, %v330
    %v347 = vpack.c.bf16 %v333, %v332
    %v348 = vpack.c.bf16 %v335, %v334
    %v349 = vpack.c.bf16 %v337, %v336
    %v350 = vpack.c.bf16 %v339, %v338
    %v351 = vpack.c.bf16 %v341, %v340
    %v352 = vpack.c.bf16 %v343, %v342
    %v353 = vpack.c.bf16 %v345, %v344
    %v354 = vld [vmem:[%s2] sm:$0xf]
    %v355 = vld [vmem:[%s2 + $0x4] sm:$0xf]
    %v356 = vld [vmem:[%s2 + $0x8] sm:$0xf]
    %v357 = vld [vmem:[%s2 + $0xc] sm:$0xf]
    %v358 = vld [vmem:[%s2 + $0x10] sm:$0xf]
    %v359 = vld [vmem:[%s2 + $0x14] sm:$0xf]
    %v360 = vld [vmem:[%s2 + $0x18] sm:$0xf]
    %v361 = vld [vmem:[%s2 + $0x1c] sm:$0xf]
    %v362 = vld [vmem:[%s2 + $0x20] sm:$0xf]
    %v363 = vld [vmem:[%s2 + $0x24] sm:$0xf]
    %v364 = vld [vmem:[%s2 + $0x28] sm:$0xf]
    %v365 = vld [vmem:[%s2 + $0x2c] sm:$0xf]
    %v366 = vld [vmem:[%s2 + $0x30] sm:$0xf]
    %v367 = vld [vmem:[%s2 + $0x34] sm:$0xf]
    %v368 = vld [vmem:[%s2 + $0x38] sm:$0xf]
    %v369 = vld [vmem:[%s2 + $0x3c] sm:$0xf]
    %v370 = vld [vmem:[%s3] sm:$0x1]
    %v372 = vlaneseq
    %v373 = vshrl.u32 %v372, 7
    %v374 = vsub.s32 0, %v373
    %v375 = vrot.slane %v370, %v374
    %v393 = vunpack.c.l.b16 %v354
    %v394 = vunpack.c.l.b16 %v355
    %v395 = vunpack.c.l.b16 %v356
    %v396 = vunpack.c.l.b16 %v357
    %v397 = vunpack.c.l.b16 %v358
    %v398 = vunpack.c.l.b16 %v359
    %v399 = vunpack.c.l.b16 %v360
    %v400 = vunpack.c.l.b16 %v361
    %v401 = vunpack.c.l.b16 %v362
    %v402 = vunpack.c.l.b16 %v363
    %v403 = vunpack.c.l.b16 %v364
    %v404 = vunpack.c.l.b16 %v365
    %v405 = vunpack.c.l.b16 %v366
    %v406 = vunpack.c.l.b16 %v367
    %v407 = vunpack.c.l.b16 %v368
    %v408 = vunpack.c.l.b16 %v369
    %v409 = vpack.c.b16 %v394, %v393
    %v410 = vpack.c.b16 %v396, %v395
    %v411 = vpack.c.b16 %v398, %v397
    %v412 = vpack.c.b16 %v400, %v399
    %v413 = vpack.c.b16 %v402, %v401
    %v414 = vpack.c.b16 %v404, %v403
    %v415 = vpack.c.b16 %v406, %v405
    %v416 = vpack.c.b16 %v408, %v407
    %425 = vmatprep.subr.bf16.mxu0 0
    %426 = vmatpush1.bf16.msra.mxu0 %v409
    %427 = vmatprep.subr.bf16.mxu0 0
    %428 = vmatpush1.bf16.msra.mxu0 %v410
    %429 = vmatprep.subr.bf16.mxu0 0
    %430 = vmatpush1.bf16.msra.mxu0 %v411
    %431 = vmatprep.subr.bf16.mxu0 0
    %432 = vmatpush1.bf16.msra.mxu0 %v412
    %433 = vmatprep.subr.bf16.mxu0 0
    %434 = vmatpush1.bf16.msra.mxu0 %v413
    %435 = vmatprep.subr.bf16.mxu0 0
    %436 = vmatpush1.bf16.msra.mxu0 %v414
    %437 = vmatprep.subr.bf16.mxu0 0
    %438 = vmatpush1.bf16.msra.mxu0 %v415
    %439 = vmatprep.subr.bf16.mxu0 0
    %440 = vmatpush1.bf16.msra.mxu0 %v416
    %441 = vmatprep.subr.bf16.mxu0 0
    %442 = vmatpush1.bf16.msra.mxu0 0
    %443 = vmatprep.subr.bf16.mxu0 0
    %444 = vmatpush1.bf16.msra.mxu0 0
    %445 = vmatprep.subr.bf16.mxu0 0
    %446 = vmatpush1.bf16.msra.mxu0 0
    %447 = vmatprep.subr.bf16.mxu0 0
    %448 = vmatpush1.bf16.msra.mxu0 0
    %449 = vmatprep.subr.bf16.mxu0 0
    %450 = vmatpush1.bf16.msra.mxu0 0
    %451 = vmatprep.subr.bf16.mxu0 0
    %452 = vmatpush1.bf16.msra.mxu0 0
    %453 = vmatprep.subr.bf16.mxu0 0
    %454 = vmatpush1.bf16.msra.mxu0 0
    %455 = vmatprep.subr.bf16.mxu0 0
    %456 = vmatpush1.bf16.msra.mxu0 0
    %457 = vmatprep.mubr.bf16.mxu0 0
    %458 = vmatmul.mubr.bf16.gmra.mrb[0].mxu0 %v346
    %v459 = vpop.f32.mrb[0].mxu0
    %v460 = vadd.f32 %v375, %v459
    %v461 = vpop.f32.mrb[0].mxu0
    %v462 = vpop.f32.mrb[0].mxu0
    %v463 = vadd.f32 %v375, %v462
    %v464 = vpop.f32.mrb[0].mxu0
    %465 = vmatprep.mubr.bf16.mxu0 0
    %466 = vmatmul.mubr.bf16.gmra.mrb[0].mxu0 %v347
    %v467 = vpop.f32.mrb[0].mxu0
    %v468 = vadd.f32 %v375, %v467
    %v469 = vpop.f32.mrb[0].mxu0
    %v470 = vpop.f32.mrb[0].mxu0
    %v471 = vadd.f32 %v375, %v470
    %v472 = vpop.f32.mrb[0].mxu0
    %473 = vmatprep.mubr.bf16.mxu0 0
    %474 = vmatmul.mubr.bf16.gmra.mrb[0].mxu0 %v348
    %v475 = vpop.f32.mrb[0].mxu0
    %v476 = vadd.f32 %v375, %v475
    %v477 = vpop.f32.mrb[0].mxu0
    %v478 = vpop.f32.mrb[0].mxu0
    %v479 = vadd.f32 %v375, %v478
    %v480 = vpop.f32.mrb[0].mxu0
    %481 = vmatprep.mubr.bf16.mxu0 0
    %482 = vmatmul.mubr.bf16.gmra.mrb[0].mxu0 %v349
    %v483 = vpop.f32.mrb[0].mxu0
    %v484 = vadd.f32 %v375, %v483
    %v485 = vpop.f32.mrb[0].mxu0
    %v486 = vpop.f32.mrb[0].mxu0
    %v487 = vadd.f32 %v375, %v486
    %v488 = vpop.f32.mrb[0].mxu0
    %489 = vmatprep.mubr.bf16.mxu0 0
    %490 = vmatmul.mubr.bf16.gmra.mrb[0].mxu0 %v350
    %v491 = vpop.f32.mrb[0].mxu0
    %v492 = vadd.f32 %v375, %v491
    %v493 = vpop.f32.mrb[0].mxu0
    %v494 = vpop.f32.mrb[0].mxu0
    %v495 = vadd.f32 %v375, %v494
    %v496 = vpop.f32.mrb[0].mxu0
    %497 = vmatprep.mubr.bf16.mxu0 0
    %498 = vmatmul.mubr.bf16.gmra.mrb[0].mxu0 %v351
    %v499 = vpop.f32.mrb[0].mxu0
    %v500 = vadd.f32 %v375, %v499
    %v501 = vpop.f32.mrb[0].mxu0
    %v502 = vpop.f32.mrb[0].mxu0
    %v503 = vadd.f32 %v375, %v502
    %v504 = vpop.f32.mrb[0].mxu0
    %505 = vmatprep.mubr.bf16.mxu0 0
    %506 = vmatmul.mubr.bf16.gmra.mrb[0].mxu0 %v352
    %v507 = vpop.f32.mrb[0].mxu0
    %v508 = vadd.f32 %v375, %v507
    %v509 = vpop.f32.mrb[0].mxu0
    %v510 = vpop.f32.mrb[0].mxu0
    %v511 = vadd.f32 %v375, %v510
    %v512 = vpop.f32.mrb[0].mxu0
    %513 = vmatprep.mubr.bf16.mxu0 0
    %514 = vmatmul.mubr.bf16.gmra.mrb[0].mxu0 %v353
    %v515 = vpop.f32.mrb[0].mxu0
    %v516 = vadd.f32 %v375, %v515
    %v517 = vpop.f32.mrb[0].mxu0
    %v518 = vpop.f32.mrb[0].mxu0
    %v519 = vadd.f32 %v375, %v518
    %v520 = vpop.f32.mrb[0].mxu0
    %521 = vdwg.mxu0
    %522 = vmax.xlane.f32.xlu0 %v460
    %v523 = vpop.xlane.xlu0 %522
    %524 = vmax.xlane.f32.xlu0 %v463
    %v525 = vpop.xlane.xlu0 %524
    %526 = vmax.xlane.f32.xlu0 %v468
    %v527 = vpop.xlane.xlu0 %526
    %528 = vmax.xlane.f32.xlu0 %v471
    %v529 = vpop.xlane.xlu0 %528
    %530 = vmax.xlane.f32.xlu0 %v476
    %v531 = vpop.xlane.xlu0 %530
    %532 = vmax.xlane.f32.xlu0 %v479
    %v533 = vpop.xlane.xlu0 %532
    %534 = vmax.xlane.f32.xlu0 %v484
    %v535 = vpop.xlane.xlu0 %534
    %536 = vmax.xlane.f32.xlu0 %v487
    %v537 = vpop.xlane.xlu0 %536
    %538 = vmax.xlane.f32.xlu0 %v492
    %v539 = vpop.xlane.xlu0 %538
    %540 = vmax.xlane.f32.xlu0 %v495
    %v541 = vpop.xlane.xlu0 %540
    %542 = vmax.xlane.f32.xlu0 %v500
    %v543 = vpop.xlane.xlu0 %542
    %544 = vmax.xlane.f32.xlu0 %v503
    %v545 = vpop.xlane.xlu0 %544
    %546 = vmax.xlane.f32.xlu0 %v508
    %v547 = vpop.xlane.xlu0 %546
    %548 = vmax.xlane.f32.xlu0 %v511
    %v549 = vpop.xlane.xlu0 %548
    %550 = vmax.xlane.f32.xlu0 %v516
    %v551 = vpop.xlane.xlu0 %550
    %552 = vmax.xlane.f32.xlu0 %v519
    %v553 = vpop.xlane.xlu0 %552
    %v554 = vsub.f32 %v460, %v523
    %v555 = vsub.f32 %v463, %v525
    %v556 = vsub.f32 %v468, %v527
    %v557 = vsub.f32 %v471, %v529
    %v558 = vsub.f32 %v476, %v531
    %v559 = vsub.f32 %v479, %v533
    %v560 = vsub.f32 %v484, %v535
    %v561 = vsub.f32 %v487, %v537
    %v562 = vsub.f32 %v492, %v539
    %v563 = vsub.f32 %v495, %v541
    %v564 = vsub.f32 %v500, %v543
    %v565 = vsub.f32 %v503, %v545
    %v566 = vsub.f32 %v508, %v547
    %v567 = vsub.f32 %v511, %v549
    %v568 = vsub.f32 %v516, %v551
    %v569 = vsub.f32 %v519, %v553
    %v570 = vmul.f32 %v554, 1.442695
    %v571 = vpow.pop %v570
    %v572 = vmul.f32 %v555, 1.442695
    %v573 = vpow.pop %v572
    %v574 = vmul.f32 %v556, 1.442695
    %v575 = vpow.pop %v574
    %v576 = vmul.f32 %v557, 1.442695
    %v577 = vpow.pop %v576
    %v578 = vmul.f32 %v558, 1.442695
    %v579 = vpow.pop %v578
    %v580 = vmul.f32 %v559, 1.442695
    %v581 = vpow.pop %v580
    %v582 = vmul.f32 %v560, 1.442695
    %v583 = vpow.pop %v582
    %v584 = vmul.f32 %v561, 1.442695
    %v585 = vpow.pop %v584
    %v586 = vmul.f32 %v562, 1.442695
    %v587 = vpow.pop %v586
    %v588 = vmul.f32 %v563, 1.442695
    %v589 = vpow.pop %v588
    %v590 = vmul.f32 %v564, 1.442695
    %v591 = vpow.pop %v590
    %v592 = vmul.f32 %v565, 1.442695
    %v593 = vpow.pop %v592
    %v594 = vmul.f32 %v566, 1.442695
    %v595 = vpow.pop %v594
    %v596 = vmul.f32 %v567, 1.442695
    %v597 = vpow.pop %v596
    %v598 = vmul.f32 %v568, 1.442695
    %v599 = vpow.pop %v598
    %v600 = vmul.f32 %v569, 1.442695
    %v601 = vpow.pop %v600
    %602 = vadd.xlane.f32.xlu0 %v571
    %v603 = vpop.xlane.xlu0 %602
    %604 = vadd.xlane.f32.xlu0 %v573
    %v605 = vpop.xlane.xlu0 %604
    %606 = vadd.xlane.f32.xlu0 %v575
    %v607 = vpop.xlane.xlu0 %606
    %608 = vadd.xlane.f32.xlu0 %v577
    %v609 = vpop.xlane.xlu0 %608
    %610 = vadd.xlane.f32.xlu0 %v579
    %v611 = vpop.xlane.xlu0 %610
    %612 = vadd.xlane.f32.xlu0 %v581
    %v613 = vpop.xlane.xlu0 %612
    %614 = vadd.xlane.f32.xlu0 %v583
    %v615 = vpop.xlane.xlu0 %614
    %616 = vadd.xlane.f32.xlu0 %v585
    %v617 = vpop.xlane.xlu0 %616
    %618 = vadd.xlane.f32.xlu0 %v587
    %v619 = vpop.xlane.xlu0 %618
    %620 = vadd.xlane.f32.xlu0 %v589
    %v621 = vpop.xlane.xlu0 %620
    %622 = vadd.xlane.f32.xlu0 %v591
    %v623 = vpop.xlane.xlu0 %622
    %624 = vadd.xlane.f32.xlu0 %v593
    %v625 = vpop.xlane.xlu0 %624
    %626 = vadd.xlane.f32.xlu0 %v595
    %v627 = vpop.xlane.xlu0 %626
    %628 = vadd.xlane.f32.xlu0 %v597
    %v629 = vpop.xlane.xlu0 %628
    %630 = vadd.xlane.f32.xlu0 %v599
    %v631 = vpop.xlane.xlu0 %630
    %632 = vadd.xlane.f32.xlu0 %v601
    %v633 = vpop.xlane.xlu0 %632
    %v634 = vlog2.pop %v603
    %v635 = vmul.f32 %v634, 0.6931472
    %v636 = vlog2.pop %v605
    %v637 = vmul.f32 %v636, 0.6931472
    %v638 = vlog2.pop %v607
    %v639 = vmul.f32 %v638, 0.6931472
    %v640 = vlog2.pop %v609
    %v641 = vmul.f32 %v640, 0.6931472
    %v642 = vlog2.pop %v611
    %v643 = vmul.f32 %v642, 0.6931472
    %v644 = vlog2.pop %v613
    %v645 = vmul.f32 %v644, 0.6931472
    %v646 = vlog2.pop %v615
    %v647 = vmul.f32 %v646, 0.6931472
    %v648 = vlog2.pop %v617
    %v649 = vmul.f32 %v648, 0.6931472
    %v650 = vlog2.pop %v619
    %v651 = vmul.f32 %v650, 0.6931472
    %v652 = vlog2.pop %v621
    %v653 = vmul.f32 %v652, 0.6931472
    %v654 = vlog2.pop %v623
    %v655 = vmul.f32 %v654, 0.6931472
    %v656 = vlog2.pop %v625
    %v657 = vmul.f32 %v656, 0.6931472
    %v658 = vlog2.pop %v627
    %v659 = vmul.f32 %v658, 0.6931472
    %v660 = vlog2.pop %v629
    %v661 = vmul.f32 %v660, 0.6931472
    %v662 = vlog2.pop %v631
    %v663 = vmul.f32 %v662, 0.6931472
    %v664 = vlog2.pop %v633
    %v665 = vmul.f32 %v664, 0.6931472
    %v666 = vsub.f32 %v554, %v635
    %v667 = vsub.f32 %v555, %v637
    %v668 = vsub.f32 %v556, %v639
    %v669 = vsub.f32 %v557, %v641
    %v670 = vsub.f32 %v558, %v643
    %v671 = vsub.f32 %v559, %v645
    %v672 = vsub.f32 %v560, %v647
    %v673 = vsub.f32 %v561, %v649
    %v674 = vsub.f32 %v562, %v651
    %v675 = vsub.f32 %v563, %v653
    %v676 = vsub.f32 %v564, %v655
    %v677 = vsub.f32 %v565, %v657
    %v678 = vsub.f32 %v566, %v659
    %v679 = vsub.f32 %v567, %v661
    %v680 = vsub.f32 %v568, %v663
    %v681 = vsub.f32 %v569, %v665
    %682 = vst [vmem:[%s4] sm:$0xff] %v666
    %683 = vst [vmem:[%s4 + $0x8] sm:$0xff] %v667
    %684 = vst [vmem:[%s4 + $0x10] sm:$0xff] %v668
    %685 = vst [vmem:[%s4 + $0x18] sm:$0xff] %v669
    %686 = vst [vmem:[%s4 + $0x20] sm:$0xff] %v670
    %687 = vst [vmem:[%s4 + $0x28] sm:$0xff] %v671
    %688 = vst [vmem:[%s4 + $0x30] sm:$0xff] %v672
    %689 = vst [vmem:[%s4 + $0x38] sm:$0xff] %v673
    %690 = vst [vmem:[%s4 + $0x40] sm:$0xff] %v674
    %691 = vst [vmem:[%s4 + $0x48] sm:$0xff] %v675
    %692 = vst [vmem:[%s4 + $0x50] sm:$0xff] %v676
    %693 = vst [vmem:[%s4 + $0x58] sm:$0xff] %v677
    %694 = vst [vmem:[%s4 + $0x60] sm:$0xff] %v678
    %695 = vst [vmem:[%s4 + $0x68] sm:$0xff] %v679
    %696 = vst [vmem:[%s4 + $0x70] sm:$0xff] %v680
    %697 = vst [vmem:[%s4 + $0x78] sm:$0xff] %v681
  $region25: #{_lambda_.5} parent=0 // pred_fallthru
    _
  // Predicated region
  $region26: #{_lambda_.5} parent=0 // pred_check
    _
  $region27: #{_lambda_.5} parent=0 // pred_check_branch
    %699 = sbr.rel (0) target = $region29
  $region28: #{_lambda_.5} parent=0 // pred_region
    _
  $region29: #{_lambda_.5} parent=0 // pred_fallthru
    _
  // Predicated region
  $region30: #{_lambda_.5} parent=0 // pred_check
    _
  $region31: #{_lambda_.5} parent=0 // pred_check_branch
    %701 = sbr.rel (0) target = $region33
  $region32: #{_lambda_.5} parent=0 // pred_region
    _
  $region33: #{_lambda_.5} parent=0 // pred_fallthru
    _

</llo_original>
